<compile_context>
chip_gen: v7x
topology: tpu7x:2x2x1
jax: 0.10.0
libtpu: 0.0.40
codegen_flags: <defaults>
</compile_context>

<pallas_src>
import functools

import jax
import jax.numpy as jnp
from jax import lax
from jax.experimental import pallas as pl
from jax.experimental.pallas import tpu as pltpu


def _round_up(x, m):
    return (x + m - 1) // m * m


def _gru_classifier_kernel(
    x_ref,        # (Tc*Bp, F)   time-chunk, rows [t*Bp:(t+1)*Bp] = timestep t
    wih_ref,      # (F, 3*Hp)    input->gate weights (transposed, gate-padded)
    whh_ref,      # (Hp, 3*Hp)   hidden->gate weights (transposed, padded)
    bih_ref,      # (1, 3*Hp)
    bhh_ref,      # (1, 3*Hp)
    gamma_ref,    # (1, Hp)      BN weight
    beta_ref,     # (1, Hp)      BN bias
    rmean_ref,    # (1, Hp)      BN running mean
    rvar_ref,     # (1, Hp)      BN running var
    wlin_ref,     # (Hp, C)      final Linear weight (transposed, row-padded)
    blin_ref,     # (1, C)
    out_ref,      # (Bp, C)
    h_scratch,    # (Bp, Hp)        VMEM: hidden state carried across chunks
    gi_scratch,   # (Tc*Bp, 3*Hp)   VMEM: hoisted input projection of this chunk
):
    Hp = whh_ref.shape[0]
    Bp = h_scratch.shape[0]
    Tc = x_ref.shape[0] // Bp

    c = pl.program_id(0)

    @pl.when(c == 0)
    def _():
        h_scratch[...] = jnp.zeros_like(h_scratch)

    # ---- phase 1: input projection hoisted off the serial path --------------
    # One (Tc*Bp, F) @ (F, 3*Hp) matmul per chunk instead of Tc tiny matmuls.
    gi_scratch[...] = (
        jnp.dot(x_ref[...], wih_ref[...], preferred_element_type=jnp.float32)
        + bih_ref[...]
    )

    # ---- phase 2: serial GRU recurrence, h carried as a loop value ----------
    def step(t, h):
        row = pl.multiple_of(t * Bp, Bp)
        gi = gi_scratch[pl.ds(row, Bp), :]                       # (Bp, 3*Hp)
        gh = (
            jnp.dot(h, whh_ref[...], preferred_element_type=jnp.float32)
            + bhh_ref[...]
        )
        # Hp is a multiple of 128, so every gate slice is 128-lane aligned.
        i_r, i_z, i_n = gi[:, 0:Hp], gi[:, Hp:2 * Hp], gi[:, 2 * Hp:3 * Hp]
        h_r, h_z, h_n = gh[:, 0:Hp], gh[:, Hp:2 * Hp], gh[:, 2 * Hp:3 * Hp]
        r = jax.nn.sigmoid(i_r + h_r)
        z = jax.nn.sigmoid(i_z + h_z)
        n = jnp.tanh(i_n + r * h_n)
        return (1.0 - z) * n + z * h

    h = lax.fori_loop(
        0, Tc, step, h_scratch[...], unroll=True if Tc <= 32 else 8
    )
    h_scratch[...] = h

    # ---- phase 3: regressor on the final hidden state ------------------------
    @pl.when(c == pl.num_programs(0) - 1)
    def _():
        # BatchNorm1d (eval) -> ReLU -> Dropout(identity) -> Linear
        eps = jnp.float32(1e-5)
        xb = (h - rmean_ref[...]) * lax.rsqrt(rvar_ref[...] + eps)
        xb = xb * gamma_ref[...] + beta_ref[...]
        xb = jnp.maximum(xb, 0.0)
        out_ref[...] = (
            jnp.dot(xb, wlin_ref[...], preferred_element_type=jnp.float32)
            + blin_ref[...]
        )


def _pad_axis(a, axis, new_size, value=0.0):
    pad = [(0, 0)] * a.ndim
    pad[axis] = (0, new_size - a.shape[axis])
    return jnp.pad(a, pad, constant_values=value)


def _pad_gate_cols(w, H, Hp):
    """(K, 3H) -> (K, 3*Hp): zero-pad each r/z/n gate block to Hp lanes."""
    K = w.shape[0]
    w3 = w.reshape(K, 3, H)
    w3 = jnp.pad(w3, ((0, 0), (0, 0), (0, Hp - H)))
    return w3.reshape(K, 3 * Hp)


@functools.partial(
    jax.jit, static_argnames=("hidden_size", "n_state", "time_chunk")
)
def lstm_classifier_forward(x_btf, params, *, hidden_size, n_state,
                            time_chunk=None):
    """x_btf: (B, T, F) float32 -> (B, n_state) float32."""
    B, T, F = x_btf.shape
    H, C = hidden_size, n_state

    # TPU-friendly padding: hidden/gate axes to 128 lanes, batch to 8 sublanes.
    Hp = _round_up(H, 128)
    Bp = _round_up(B, 8)

    # Time chunk per grid step (must divide T; no time padding — GRU biases
    # would keep updating h on fake steps).  For small T: one chunk.
    Tc = T if (time_chunk is None or T % time_chunk != 0) else time_chunk
    num_chunks = T // Tc

    # Layout: time-major, batch-padded, flattened so rows [t*Bp:(t+1)*Bp] are
    # timestep t — lets the chunk projection be a single 2-D matmul.
    x_tbf = jnp.transpose(x_btf, (1, 0, 2))          # (T, B, F)
    x_tbf = _pad_axis(x_tbf, 1, Bp)                  # (T, Bp, F)
    x_flat = x_tbf.reshape(T * Bp, F)                # (T*Bp, F)

    # Weights: pre-transposed, gate blocks padded to 128-lane boundaries.
    w_ih = _pad_gate_cols(params["w_ih_t"], H, Hp)               # (F, 3Hp)
    w_hh = _pad_axis(_pad_gate_cols(params["w_hh_t"], H, Hp), 0, Hp)  # (Hp, 3Hp)
    b_ih = _pad_gate_cols(params["b_ih"], H, Hp)                 # (1, 3Hp)
    b_hh = _pad_gate_cols(params["b_hh"], H, Hp)                 # (1, 3Hp)

    gamma = _pad_axis(params["bn_gamma"], 1, Hp)                 # (1, Hp)
    beta = _pad_axis(params["bn_beta"], 1, Hp)
    rmean = _pad_axis(params["bn_mean"], 1, Hp)
    rvar = _pad_axis(params["bn_var"], 1, Hp, value=1.0)
    w_lin = _pad_axis(params["w_lin_t"], 0, Hp)                  # (Hp, C)
    b_lin = params["b_lin"]                                      # (1, C)

    const2d = lambda shape: pl.BlockSpec(shape, lambda c: (0, 0))

    grid_spec = pltpu.PrefetchScalarGridSpec(
        num_scalar_prefetch=0,
        grid=(num_chunks,),
        in_specs=[
            pl.BlockSpec((Tc * Bp, F), lambda c: (c, 0)),  # x time-chunk
            const2d((F, 3 * Hp)),   # W_ih^T
            const2d((Hp, 3 * Hp)),  # W_hh^T
            const2d((1, 3 * Hp)),   # b_ih
            const2d((1, 3 * Hp)),   # b_hh
            const2d((1, Hp)),       # BN gamma
            const2d((1, Hp)),       # BN beta
            const2d((1, Hp)),       # BN running mean
            const2d((1, Hp)),       # BN running var
            const2d((Hp, C)),       # W_lin^T
            const2d((1, C)),        # b_lin
        ],
        out_specs=pl.BlockSpec((Bp, C), lambda c: (0, 0)),
        scratch_shapes=[
            pltpu.VMEM((Bp, Hp), jnp.float32),            # hidden state
            pltpu.VMEM((Tc * Bp, 3 * Hp), jnp.float32),   # hoisted projection
        ],
    )

    out_padded = pl.pallas_call(
        _gru_classifier_kernel,
        out_shape=jax.ShapeDtypeStruct((Bp, C), jnp.float32),
        grid_spec=grid_spec,
        compiler_params=pltpu.CompilerParams(
            dimension_semantics=("arbitrary",),   # sequential recurrence
            vmem_limit_bytes=32 * 1024 * 1024,
        ),
    )(
        x_flat, w_ih, w_hh, b_ih, b_hh,
        gamma, beta, rmean, rvar, w_lin, b_lin,
    )
    return out_padded[:B, :]


def init_params(key, feature_size, hidden_size, n_state):
    """Deterministic parameter init mirroring nn.GRU / nn.Linear shapes."""
    H, F, C = hidden_size, feature_size, n_state
    ks = jax.random.split(key, 6)
    s_rnn = 1.0 / jnp.sqrt(jnp.float32(H))
    s_lin = 1.0 / jnp.sqrt(jnp.float32(H))
    u = lambda k, shape, s: jax.random.uniform(k, shape, jnp.float32, -s, s)
    return {
        # stored already transposed for the kernel's x @ W^T layout
        "w_ih_t": u(ks[0], (F, 3 * H), s_rnn),
        "w_hh_t": u(ks[1], (H, 3 * H), s_rnn),
        "b_ih":   u(ks[2], (1, 3 * H), s_rnn),
        "b_hh":   u(ks[3], (1, 3 * H), s_rnn),
        "bn_gamma": jnp.ones((1, H), jnp.float32),
        "bn_beta":  jnp.zeros((1, H), jnp.float32),
        "bn_mean":  jnp.zeros((1, H), jnp.float32),
        "bn_var":   jnp.ones((1, H), jnp.float32),
        "w_lin_t": u(ks[4], (H, C), s_lin),
        "b_lin":   u(ks[5], (1, C), s_lin),
    }


def _reference_forward(x_btf, params, hidden_size, n_state):
    """Pure-JAX reference of the same forward pass (for sanity checking)."""
    B, T, F = x_btf.shape
    H = hidden_size
    h = jnp.zeros((B, H), jnp.float32)
    for t in range(T):
        x_t = x_btf[:, t, :]
        gi = x_t @ params["w_ih_t"] + params["b_ih"]
        gh = h @ params["w_hh_t"] + params["b_hh"]
        i_r, i_z, i_n = gi[:, :H], gi[:, H:2 * H], gi[:, 2 * H:]
        h_r, h_z, h_n = gh[:, :H], gh[:, H:2 * H], gh[:, 2 * H:]
        r = jax.nn.sigmoid(i_r + h_r)
        z = jax.nn.sigmoid(i_z + h_z)
        n = jnp.tanh(i_n + r * h_n)
        h = (1.0 - z) * n + z * h
    xb = (h - params["bn_mean"]) / jnp.sqrt(params["bn_var"] + 1e-5)
    xb = xb * params["bn_gamma"] + params["bn_beta"]
    xb = jnp.maximum(xb, 0.0)
    return xb @ params["w_lin_t"] + params["b_lin"]


if __name__ == "__main__":
    # small shapes consistent with the module: batch=2, seq=8, feature=4,
    # hidden=32, n_state=5
    batch, seq_len, feature_size = 2, 8, 4
    hidden_size, n_state = 32, 5

    key = jax.random.PRNGKey(0)
    k_x, k_p = jax.random.split(key)
    x = jax.random.normal(k_x, (batch, seq_len, feature_size), jnp.float32)
    params = init_params(k_p, feature_size, hidden_size, n_state)

    out = lstm_classifier_forward(
        x, params, hidden_size=hidden_size, n_state=n_state
    )
    out = jax.block_until_ready(out)

    ref = _reference_forward(x, params, hidden_size, n_state)
    assert out.shape == (batch, n_state)
    assert jnp.allclose(out, ref, atol=1e-4, rtol=1e-4)

    print("KERNEL_OK")
</pallas_src>

<mosaic_0001>
module attributes {stable_mosaic.version = 11 : i64} {
  func.func @_gru_classifier_kernel(%arg0: i32, %arg1: memref<64x4xf32, #tpu.memory_space<vmem>>, %arg2: memref<4x384xf32, #tpu.memory_space<vmem>>, %arg3: memref<128x384xf32, #tpu.memory_space<vmem>>, %arg4: memref<1x384xf32, #tpu.memory_space<vmem>>, %arg5: memref<1x384xf32, #tpu.memory_space<vmem>>, %arg6: memref<1x128xf32, #tpu.memory_space<vmem>>, %arg7: memref<1x128xf32, #tpu.memory_space<vmem>>, %arg8: memref<1x128xf32, #tpu.memory_space<vmem>>, %arg9: memref<1x128xf32, #tpu.memory_space<vmem>>, %arg10: memref<128x5xf32, #tpu.memory_space<vmem>>, %arg11: memref<1x5xf32, #tpu.memory_space<vmem>>, %arg12: memref<8x5xf32, #tpu.memory_space<vmem>>, %arg13: memref<8x128xf32, #tpu.memory_space<vmem>>, %arg14: memref<64x384xf32, #tpu.memory_space<vmem>>) attributes {dimension_semantics = [#tpu.dimension_semantics<arbitrary>], iteration_bounds = array<i64: 1>, scalar_prefetch = 0 : i64, scratch_operands = 2 : i64, tpu.core_type = #tpu.core_type<tc>, window_params = [{transform_indices = @transform_0, window_bounds = array<i64: 64, 4>}, {pipeline_mode = #tpu.pipeline_mode<synchronous>, transform_indices = @transform_1, window_bounds = array<i64: 4, 384>}, {pipeline_mode = #tpu.pipeline_mode<synchronous>, transform_indices = @transform_2, window_bounds = array<i64: 128, 384>}, {pipeline_mode = #tpu.pipeline_mode<synchronous>, transform_indices = @transform_3, window_bounds = array<i64: 1, 384>}, {pipeline_mode = #tpu.pipeline_mode<synchronous>, transform_indices = @transform_4, window_bounds = array<i64: 1, 384>}, {pipeline_mode = #tpu.pipeline_mode<synchronous>, transform_indices = @transform_5, window_bounds = array<i64: 1, 128>}, {pipeline_mode = #tpu.pipeline_mode<synchronous>, transform_indices = @transform_6, window_bounds = array<i64: 1, 128>}, {pipeline_mode = #tpu.pipeline_mode<synchronous>, transform_indices = @transform_7, window_bounds = array<i64: 1, 128>}, {pipeline_mode = #tpu.pipeline_mode<synchronous>, transform_indices = @transform_8, window_bounds = array<i64: 1, 128>}, {pipeline_mode = #tpu.pipeline_mode<synchronous>, transform_indices = @transform_9, window_bounds = array<i64: 128, 5>}, {pipeline_mode = #tpu.pipeline_mode<synchronous>, transform_indices = @transform_10, window_bounds = array<i64: 1, 5>}, {pipeline_mode = #tpu.pipeline_mode<synchronous>, transform_indices = @transform_11, window_bounds = array<i64: 8, 5>}]} {
    %c0_i32 = arith.constant 0 : i32
    %0 = arith.cmpi eq, %arg0, %c0_i32 : i32
    %1 = arith.extui %0 : i1 to i32
    %c0_i32_0 = arith.constant 0 : i32
    %2 = arith.cmpi ne, %1, %c0_i32_0 : i32
    scf.if %2 {
      %cst_95 = arith.constant 0.000000e+00 : f32
      %295 = vector.broadcast %cst_95 : f32 to vector<8x128xf32>
      %c0_96 = arith.constant 0 : index
      %c0_97 = arith.constant 0 : index
      %296 = vector.load %arg13[%c0_96, %c0_97] : memref<8x128xf32, #tpu.memory_space<vmem>>, vector<8x128xf32>
      tpu.vector_store %arg13[%c0_96, %c0_97], %295 {strides = array<i32>} : memref<8x128xf32, #tpu.memory_space<vmem>>, vector<8x128xf32>,
    } else {
    }
    %c0 = arith.constant 0 : index
    %c0_1 = arith.constant 0 : index
    %3 = vector.load %arg1[%c0, %c0_1] : memref<64x4xf32, #tpu.memory_space<vmem>>, vector<64x4xf32>
    %c0_2 = arith.constant 0 : index
    %c0_3 = arith.constant 0 : index
    %4 = vector.load %arg2[%c0_2, %c0_3] : memref<4x384xf32, #tpu.memory_space<vmem>>, vector<4x384xf32>
    %cst = arith.constant dense<0.000000e+00> : vector<64x384xf32>
    %5 = tpu.matmul %3, %4, %cst {dimension_numbers = #tpu.dot_dimension_numbers<[1], [0], [0], [1], [0, 0, 1, 1], [], []>} : vector<64x4xf32>, vector<4x384xf32>, vector<64x384xf32> -> vector<64x384xf32>
    %c0_4 = arith.constant 0 : index
    %c0_5 = arith.constant 0 : index
    %6 = vector.load %arg4[%c0_4, %c0_5] : memref<1x384xf32, #tpu.memory_space<vmem>>, vector<1x384xf32>
    %7 = vector.broadcast %6 : vector<1x384xf32> to vector<64x384xf32>
    %8 = arith.addf %5, %7 : vector<64x384xf32>
    %c0_6 = arith.constant 0 : index
    %c0_7 = arith.constant 0 : index
    %9 = vector.load %arg14[%c0_6, %c0_7] : memref<64x384xf32, #tpu.memory_space<vmem>>, vector<64x384xf32>
    tpu.vector_store %arg14[%c0_6, %c0_7], %8 {strides = array<i32>} : memref<64x384xf32, #tpu.memory_space<vmem>>, vector<64x384xf32>,
    %c0_8 = arith.constant 0 : index
    %c0_9 = arith.constant 0 : index
    %10 = vector.load %arg13[%c0_8, %c0_9] : memref<8x128xf32, #tpu.memory_space<vmem>>, vector<8x128xf32>
    %c0_i32_10 = arith.constant 0 : i32
    %c8_i32 = arith.constant 8 : i32
    %11 = arith.muli %c0_i32_10, %c8_i32 : i32
    %12 = tpu.assume_multiple %11, 8 : i32
    %13 = arith.index_cast %12 : i32 to index
    %c0_11 = arith.constant 0 : index
    %14 = vector.load %arg14[%13, %c0_11] : memref<64x384xf32, #tpu.memory_space<vmem>>, vector<8x384xf32>
    %c0_12 = arith.constant 0 : index
    %c0_13 = arith.constant 0 : index
    %15 = vector.load %arg3[%c0_12, %c0_13] : memref<128x384xf32, #tpu.memory_space<vmem>>, vector<128x384xf32>
    %cst_14 = arith.constant dense<0.000000e+00> : vector<8x384xf32>
    %16 = tpu.matmul %10, %15, %cst_14 {dimension_numbers = #tpu.dot_dimension_numbers<[1], [0], [0], [1], [0, 0, 1, 1], [], []>} : vector<8x128xf32>, vector<128x384xf32>, vector<8x384xf32> -> vector<8x384xf32>
    %c0_15 = arith.constant 0 : index
    %c0_16 = arith.constant 0 : index
    %17 = vector.load %arg5[%c0_15, %c0_16] : memref<1x384xf32, #tpu.memory_space<vmem>>, vector<1x384xf32>
    %18 = vector.broadcast %17 : vector<1x384xf32> to vector<8x384xf32>
    %19 = arith.addf %16, %18 : vector<8x384xf32>
    %20 = vector.extract_strided_slice %14 {offsets = [0, 0], sizes = [8, 128], strides = [1, 1]} : vector<8x384xf32> to vector<8x128xf32>
    %21 = vector.extract_strided_slice %14 {offsets = [0, 128], sizes = [8, 128], strides = [1, 1]} : vector<8x384xf32> to vector<8x128xf32>
    %22 = vector.extract_strided_slice %14 {offsets = [0, 256], sizes = [8, 128], strides = [1, 1]} : vector<8x384xf32> to vector<8x128xf32>
    %23 = vector.extract_strided_slice %19 {offsets = [0, 0], sizes = [8, 128], strides = [1, 1]} : vector<8x384xf32> to vector<8x128xf32>
    %24 = vector.extract_strided_slice %19 {offsets = [0, 128], sizes = [8, 128], strides = [1, 1]} : vector<8x384xf32> to vector<8x128xf32>
    %25 = vector.extract_strided_slice %19 {offsets = [0, 256], sizes = [8, 128], strides = [1, 1]} : vector<8x384xf32> to vector<8x128xf32>
    %26 = arith.addf %20, %23 : vector<8x128xf32>
    %27 = arith.negf %26 : vector<8x128xf32>
    %28 = math.exp %27 : vector<8x128xf32>
    %cst_17 = arith.constant 1.000000e+00 : f32
    %29 = vector.broadcast %cst_17 : f32 to vector<8x128xf32>
    %30 = arith.addf %29, %28 : vector<8x128xf32>
    %31 = arith.divf %29, %30 : vector<8x128xf32>
    %32 = arith.addf %21, %24 : vector<8x128xf32>
    %33 = arith.negf %32 : vector<8x128xf32>
    %34 = math.exp %33 : vector<8x128xf32>
    %cst_18 = arith.constant 1.000000e+00 : f32
    %35 = vector.broadcast %cst_18 : f32 to vector<8x128xf32>
    %36 = arith.addf %35, %34 : vector<8x128xf32>
    %37 = arith.divf %35, %36 : vector<8x128xf32>
    %38 = arith.mulf %31, %25 : vector<8x128xf32>
    %39 = arith.addf %22, %38 : vector<8x128xf32>
    %40 = math.tanh %39 : vector<8x128xf32>
    %cst_19 = arith.constant 1.000000e+00 : f32
    %41 = vector.broadcast %cst_19 : f32 to vector<8x128xf32>
    %42 = arith.subf %41, %37 : vector<8x128xf32>
    %43 = arith.mulf %42, %40 : vector<8x128xf32>
    %44 = arith.mulf %37, %10 : vector<8x128xf32>
    %45 = arith.addf %43, %44 : vector<8x128xf32>
    %c1_i32 = arith.constant 1 : i32
    %c8_i32_20 = arith.constant 8 : i32
    %46 = arith.muli %c1_i32, %c8_i32_20 : i32
    %47 = tpu.assume_multiple %46, 8 : i32
    %48 = arith.index_cast %47 : i32 to index
    %c0_21 = arith.constant 0 : index
    %49 = vector.load %arg14[%48, %c0_21] : memref<64x384xf32, #tpu.memory_space<vmem>>, vector<8x384xf32>
    %c0_22 = arith.constant 0 : index
    %c0_23 = arith.constant 0 : index
    %50 = vector.load %arg3[%c0_22, %c0_23] : memref<128x384xf32, #tpu.memory_space<vmem>>, vector<128x384xf32>
    %cst_24 = arith.constant dense<0.000000e+00> : vector<8x384xf32>
    %51 = tpu.matmul %45, %50, %cst_24 {dimension_numbers = #tpu.dot_dimension_numbers<[1], [0], [0], [1], [0, 0, 1, 1], [], []>} : vector<8x128xf32>, vector<128x384xf32>, vector<8x384xf32> -> vector<8x384xf32>
    %c0_25 = arith.constant 0 : index
    %c0_26 = arith.constant 0 : index
    %52 = vector.load %arg5[%c0_25, %c0_26] : memref<1x384xf32, #tpu.memory_space<vmem>>, vector<1x384xf32>
    %53 = vector.broadcast %52 : vector<1x384xf32> to vector<8x384xf32>
    %54 = arith.addf %51, %53 : vector<8x384xf32>
    %55 = vector.extract_strided_slice %49 {offsets = [0, 0], sizes = [8, 128], strides = [1, 1]} : vector<8x384xf32> to vector<8x128xf32>
    %56 = vector.extract_strided_slice %49 {offsets = [0, 128], sizes = [8, 128], strides = [1, 1]} : vector<8x384xf32> to vector<8x128xf32>
    %57 = vector.extract_strided_slice %49 {offsets = [0, 256], sizes = [8, 128], strides = [1, 1]} : vector<8x384xf32> to vector<8x128xf32>
    %58 = vector.extract_strided_slice %54 {offsets = [0, 0], sizes = [8, 128], strides = [1, 1]} : vector<8x384xf32> to vector<8x128xf32>
    %59 = vector.extract_strided_slice %54 {offsets = [0, 128], sizes = [8, 128], strides = [1, 1]} : vector<8x384xf32> to vector<8x128xf32>
    %60 = vector.extract_strided_slice %54 {offsets = [0, 256], sizes = [8, 128], strides = [1, 1]} : vector<8x384xf32> to vector<8x128xf32>
    %61 = arith.addf %55, %58 : vector<8x128xf32>
    %62 = arith.negf %61 : vector<8x128xf32>
    %63 = math.exp %62 : vector<8x128xf32>
    %cst_27 = arith.constant 1.000000e+00 : f32
    %64 = vector.broadcast %cst_27 : f32 to vector<8x128xf32>
    %65 = arith.addf %64, %63 : vector<8x128xf32>
    %66 = arith.divf %64, %65 : vector<8x128xf32>
    %67 = arith.addf %56, %59 : vector<8x128xf32>
    %68 = arith.negf %67 : vector<8x128xf32>
    %69 = math.exp %68 : vector<8x128xf32>
    %cst_28 = arith.constant 1.000000e+00 : f32
    %70 = vector.broadcast %cst_28 : f32 to vector<8x128xf32>
    %71 = arith.addf %70, %69 : vector<8x128xf32>
    %72 = arith.divf %70, %71 : vector<8x128xf32>
    %73 = arith.mulf %66, %60 : vector<8x128xf32>
    %74 = arith.addf %57, %73 : vector<8x128xf32>
    %75 = math.tanh %74 : vector<8x128xf32>
    %cst_29 = arith.constant 1.000000e+00 : f32
    %76 = vector.broadcast %cst_29 : f32 to vector<8x128xf32>
    %77 = arith.subf %76, %72 : vector<8x128xf32>
    %78 = arith.mulf %77, %75 : vector<8x128xf32>
    %79 = arith.mulf %72, %45 : vector<8x128xf32>
    %80 = arith.addf %78, %79 : vector<8x128xf32>
    %c2_i32 = arith.constant 2 : i32
    %c8_i32_30 = arith.constant 8 : i32
    %81 = arith.muli %c2_i32, %c8_i32_30 : i32
    %82 = tpu.assume_multiple %81, 8 : i32
    %83 = arith.index_cast %82 : i32 to index
    %c0_31 = arith.constant 0 : index
    %84 = vector.load %arg14[%83, %c0_31] : memref<64x384xf32, #tpu.memory_space<vmem>>, vector<8x384xf32>
    %c0_32 = arith.constant 0 : index
    %c0_33 = arith.constant 0 : index
    %85 = vector.load %arg3[%c0_32, %c0_33] : memref<128x384xf32, #tpu.memory_space<vmem>>, vector<128x384xf32>
    %cst_34 = arith.constant dense<0.000000e+00> : vector<8x384xf32>
    %86 = tpu.matmul %80, %85, %cst_34 {dimension_numbers = #tpu.dot_dimension_numbers<[1], [0], [0], [1], [0, 0, 1, 1], [], []>} : vector<8x128xf32>, vector<128x384xf32>, vector<8x384xf32> -> vector<8x384xf32>
    %c0_35 = arith.constant 0 : index
    %c0_36 = arith.constant 0 : index
    %87 = vector.load %arg5[%c0_35, %c0_36] : memref<1x384xf32, #tpu.memory_space<vmem>>, vector<1x384xf32>
    %88 = vector.broadcast %87 : vector<1x384xf32> to vector<8x384xf32>
    %89 = arith.addf %86, %88 : vector<8x384xf32>
    %90 = vector.extract_strided_slice %84 {offsets = [0, 0], sizes = [8, 128], strides = [1, 1]} : vector<8x384xf32> to vector<8x128xf32>
    %91 = vector.extract_strided_slice %84 {offsets = [0, 128], sizes = [8, 128], strides = [1, 1]} : vector<8x384xf32> to vector<8x128xf32>
    %92 = vector.extract_strided_slice %84 {offsets = [0, 256], sizes = [8, 128], strides = [1, 1]} : vector<8x384xf32> to vector<8x128xf32>
    %93 = vector.extract_strided_slice %89 {offsets = [0, 0], sizes = [8, 128], strides = [1, 1]} : vector<8x384xf32> to vector<8x128xf32>
    %94 = vector.extract_strided_slice %89 {offsets = [0, 128], sizes = [8, 128], strides = [1, 1]} : vector<8x384xf32> to vector<8x128xf32>
    %95 = vector.extract_strided_slice %89 {offsets = [0, 256], sizes = [8, 128], strides = [1, 1]} : vector<8x384xf32> to vector<8x128xf32>
    %96 = arith.addf %90, %93 : vector<8x128xf32>
    %97 = arith.negf %96 : vector<8x128xf32>
    %98 = math.exp %97 : vector<8x128xf32>
    %cst_37 = arith.constant 1.000000e+00 : f32
    %99 = vector.broadcast %cst_37 : f32 to vector<8x128xf32>
    %100 = arith.addf %99, %98 : vector<8x128xf32>
    %101 = arith.divf %99, %100 : vector<8x128xf32>
    %102 = arith.addf %91, %94 : vector<8x128xf32>
    %103 = arith.negf %102 : vector<8x128xf32>
    %104 = math.exp %103 : vector<8x128xf32>
    %cst_38 = arith.constant 1.000000e+00 : f32
    %105 = vector.broadcast %cst_38 : f32 to vector<8x128xf32>
    %106 = arith.addf %105, %104 : vector<8x128xf32>
    %107 = arith.divf %105, %106 : vector<8x128xf32>
    %108 = arith.mulf %101, %95 : vector<8x128xf32>
    %109 = arith.addf %92, %108 : vector<8x128xf32>
    %110 = math.tanh %109 : vector<8x128xf32>
    %cst_39 = arith.constant 1.000000e+00 : f32
    %111 = vector.broadcast %cst_39 : f32 to vector<8x128xf32>
    %112 = arith.subf %111, %107 : vector<8x128xf32>
    %113 = arith.mulf %112, %110 : vector<8x128xf32>
    %114 = arith.mulf %107, %80 : vector<8x128xf32>
    %115 = arith.addf %113, %114 : vector<8x128xf32>
    %c3_i32 = arith.constant 3 : i32
    %c8_i32_40 = arith.constant 8 : i32
    %116 = arith.muli %c3_i32, %c8_i32_40 : i32
    %117 = tpu.assume_multiple %116, 8 : i32
    %118 = arith.index_cast %117 : i32 to index
    %c0_41 = arith.constant 0 : index
    %119 = vector.load %arg14[%118, %c0_41] : memref<64x384xf32, #tpu.memory_space<vmem>>, vector<8x384xf32>
    %c0_42 = arith.constant 0 : index
    %c0_43 = arith.constant 0 : index
    %120 = vector.load %arg3[%c0_42, %c0_43] : memref<128x384xf32, #tpu.memory_space<vmem>>, vector<128x384xf32>
    %cst_44 = arith.constant dense<0.000000e+00> : vector<8x384xf32>
    %121 = tpu.matmul %115, %120, %cst_44 {dimension_numbers = #tpu.dot_dimension_numbers<[1], [0], [0], [1], [0, 0, 1, 1], [], []>} : vector<8x128xf32>, vector<128x384xf32>, vector<8x384xf32> -> vector<8x384xf32>
    %c0_45 = arith.constant 0 : index
    %c0_46 = arith.constant 0 : index
    %122 = vector.load %arg5[%c0_45, %c0_46] : memref<1x384xf32, #tpu.memory_space<vmem>>, vector<1x384xf32>
    %123 = vector.broadcast %122 : vector<1x384xf32> to vector<8x384xf32>
    %124 = arith.addf %121, %123 : vector<8x384xf32>
    %125 = vector.extract_strided_slice %119 {offsets = [0, 0], sizes = [8, 128], strides = [1, 1]} : vector<8x384xf32> to vector<8x128xf32>
    %126 = vector.extract_strided_slice %119 {offsets = [0, 128], sizes = [8, 128], strides = [1, 1]} : vector<8x384xf32> to vector<8x128xf32>
    %127 = vector.extract_strided_slice %119 {offsets = [0, 256], sizes = [8, 128], strides = [1, 1]} : vector<8x384xf32> to vector<8x128xf32>
    %128 = vector.extract_strided_slice %124 {offsets = [0, 0], sizes = [8, 128], strides = [1, 1]} : vector<8x384xf32> to vector<8x128xf32>
    %129 = vector.extract_strided_slice %124 {offsets = [0, 128], sizes = [8, 128], strides = [1, 1]} : vector<8x384xf32> to vector<8x128xf32>
    %130 = vector.extract_strided_slice %124 {offsets = [0, 256], sizes = [8, 128], strides = [1, 1]} : vector<8x384xf32> to vector<8x128xf32>
    %131 = arith.addf %125, %128 : vector<8x128xf32>
    %132 = arith.negf %131 : vector<8x128xf32>
    %133 = math.exp %132 : vector<8x128xf32>
    %cst_47 = arith.constant 1.000000e+00 : f32
    %134 = vector.broadcast %cst_47 : f32 to vector<8x128xf32>
    %135 = arith.addf %134, %133 : vector<8x128xf32>
    %136 = arith.divf %134, %135 : vector<8x128xf32>
    %137 = arith.addf %126, %129 : vector<8x128xf32>
    %138 = arith.negf %137 : vector<8x128xf32>
    %139 = math.exp %138 : vector<8x128xf32>
    %cst_48 = arith.constant 1.000000e+00 : f32
    %140 = vector.broadcast %cst_48 : f32 to vector<8x128xf32>
    %141 = arith.addf %140, %139 : vector<8x128xf32>
    %142 = arith.divf %140, %141 : vector<8x128xf32>
    %143 = arith.mulf %136, %130 : vector<8x128xf32>
    %144 = arith.addf %127, %143 : vector<8x128xf32>
    %145 = math.tanh %144 : vector<8x128xf32>
    %cst_49 = arith.constant 1.000000e+00 : f32
    %146 = vector.broadcast %cst_49 : f32 to vector<8x128xf32>
    %147 = arith.subf %146, %142 : vector<8x128xf32>
    %148 = arith.mulf %147, %145 : vector<8x128xf32>
    %149 = arith.mulf %142, %115 : vector<8x128xf32>
    %150 = arith.addf %148, %149 : vector<8x128xf32>
    %c4_i32 = arith.constant 4 : i32
    %c8_i32_50 = arith.constant 8 : i32
    %151 = arith.muli %c4_i32, %c8_i32_50 : i32
    %152 = tpu.assume_multiple %151, 8 : i32
    %153 = arith.index_cast %152 : i32 to index
    %c0_51 = arith.constant 0 : index
    %154 = vector.load %arg14[%153, %c0_51] : memref<64x384xf32, #tpu.memory_space<vmem>>, vector<8x384xf32>
    %c0_52 = arith.constant 0 : index
    %c0_53 = arith.constant 0 : index
    %155 = vector.load %arg3[%c0_52, %c0_53] : memref<128x384xf32, #tpu.memory_space<vmem>>, vector<128x384xf32>
    %cst_54 = arith.constant dense<0.000000e+00> : vector<8x384xf32>
    %156 = tpu.matmul %150, %155, %cst_54 {dimension_numbers = #tpu.dot_dimension_numbers<[1], [0], [0], [1], [0, 0, 1, 1], [], []>} : vector<8x128xf32>, vector<128x384xf32>, vector<8x384xf32> -> vector<8x384xf32>
    %c0_55 = arith.constant 0 : index
    %c0_56 = arith.constant 0 : index
    %157 = vector.load %arg5[%c0_55, %c0_56] : memref<1x384xf32, #tpu.memory_space<vmem>>, vector<1x384xf32>
    %158 = vector.broadcast %157 : vector<1x384xf32> to vector<8x384xf32>
    %159 = arith.addf %156, %158 : vector<8x384xf32>
    %160 = vector.extract_strided_slice %154 {offsets = [0, 0], sizes = [8, 128], strides = [1, 1]} : vector<8x384xf32> to vector<8x128xf32>
    %161 = vector.extract_strided_slice %154 {offsets = [0, 128], sizes = [8, 128], strides = [1, 1]} : vector<8x384xf32> to vector<8x128xf32>
    %162 = vector.extract_strided_slice %154 {offsets = [0, 256], sizes = [8, 128], strides = [1, 1]} : vector<8x384xf32> to vector<8x128xf32>
    %163 = vector.extract_strided_slice %159 {offsets = [0, 0], sizes = [8, 128], strides = [1, 1]} : vector<8x384xf32> to vector<8x128xf32>
    %164 = vector.extract_strided_slice %159 {offsets = [0, 128], sizes = [8, 128], strides = [1, 1]} : vector<8x384xf32> to vector<8x128xf32>
    %165 = vector.extract_strided_slice %159 {offsets = [0, 256], sizes = [8, 128], strides = [1, 1]} : vector<8x384xf32> to vector<8x128xf32>
    %166 = arith.addf %160, %163 : vector<8x128xf32>
    %167 = arith.negf %166 : vector<8x128xf32>
    %168 = math.exp %167 : vector<8x128xf32>
    %cst_57 = arith.constant 1.000000e+00 : f32
    %169 = vector.broadcast %cst_57 : f32 to vector<8x128xf32>
    %170 = arith.addf %169, %168 : vector<8x128xf32>
    %171 = arith.divf %169, %170 : vector<8x128xf32>
    %172 = arith.addf %161, %164 : vector<8x128xf32>
    %173 = arith.negf %172 : vector<8x128xf32>
    %174 = math.exp %173 : vector<8x128xf32>
    %cst_58 = arith.constant 1.000000e+00 : f32
    %175 = vector.broadcast %cst_58 : f32 to vector<8x128xf32>
    %176 = arith.addf %175, %174 : vector<8x128xf32>
    %177 = arith.divf %175, %176 : vector<8x128xf32>
    %178 = arith.mulf %171, %165 : vector<8x128xf32>
    %179 = arith.addf %162, %178 : vector<8x128xf32>
    %180 = math.tanh %179 : vector<8x128xf32>
    %cst_59 = arith.constant 1.000000e+00 : f32
    %181 = vector.broadcast %cst_59 : f32 to vector<8x128xf32>
    %182 = arith.subf %181, %177 : vector<8x128xf32>
    %183 = arith.mulf %182, %180 : vector<8x128xf32>
    %184 = arith.mulf %177, %150 : vector<8x128xf32>
    %185 = arith.addf %183, %184 : vector<8x128xf32>
    %c5_i32 = arith.constant 5 : i32
    %c8_i32_60 = arith.constant 8 : i32
    %186 = arith.muli %c5_i32, %c8_i32_60 : i32
    %187 = tpu.assume_multiple %186, 8 : i32
    %188 = arith.index_cast %187 : i32 to index
    %c0_61 = arith.constant 0 : index
    %189 = vector.load %arg14[%188, %c0_61] : memref<64x384xf32, #tpu.memory_space<vmem>>, vector<8x384xf32>
    %c0_62 = arith.constant 0 : index
    %c0_63 = arith.constant 0 : index
    %190 = vector.load %arg3[%c0_62, %c0_63] : memref<128x384xf32, #tpu.memory_space<vmem>>, vector<128x384xf32>
    %cst_64 = arith.constant dense<0.000000e+00> : vector<8x384xf32>
    %191 = tpu.matmul %185, %190, %cst_64 {dimension_numbers = #tpu.dot_dimension_numbers<[1], [0], [0], [1], [0, 0, 1, 1], [], []>} : vector<8x128xf32>, vector<128x384xf32>, vector<8x384xf32> -> vector<8x384xf32>
    %c0_65 = arith.constant 0 : index
    %c0_66 = arith.constant 0 : index
    %192 = vector.load %arg5[%c0_65, %c0_66] : memref<1x384xf32, #tpu.memory_space<vmem>>, vector<1x384xf32>
    %193 = vector.broadcast %192 : vector<1x384xf32> to vector<8x384xf32>
    %194 = arith.addf %191, %193 : vector<8x384xf32>
    %195 = vector.extract_strided_slice %189 {offsets = [0, 0], sizes = [8, 128], strides = [1, 1]} : vector<8x384xf32> to vector<8x128xf32>
    %196 = vector.extract_strided_slice %189 {offsets = [0, 128], sizes = [8, 128], strides = [1, 1]} : vector<8x384xf32> to vector<8x128xf32>
    %197 = vector.extract_strided_slice %189 {offsets = [0, 256], sizes = [8, 128], strides = [1, 1]} : vector<8x384xf32> to vector<8x128xf32>
    %198 = vector.extract_strided_slice %194 {offsets = [0, 0], sizes = [8, 128], strides = [1, 1]} : vector<8x384xf32> to vector<8x128xf32>
    %199 = vector.extract_strided_slice %194 {offsets = [0, 128], sizes = [8, 128], strides = [1, 1]} : vector<8x384xf32> to vector<8x128xf32>
    %200 = vector.extract_strided_slice %194 {offsets = [0, 256], sizes = [8, 128], strides = [1, 1]} : vector<8x384xf32> to vector<8x128xf32>
    %201 = arith.addf %195, %198 : vector<8x128xf32>
    %202 = arith.negf %201 : vector<8x128xf32>
    %203 = math.exp %202 : vector<8x128xf32>
    %cst_67 = arith.constant 1.000000e+00 : f32
    %204 = vector.broadcast %cst_67 : f32 to vector<8x128xf32>
    %205 = arith.addf %204, %203 : vector<8x128xf32>
    %206 = arith.divf %204, %205 : vector<8x128xf32>
    %207 = arith.addf %196, %199 : vector<8x128xf32>
    %208 = arith.negf %207 : vector<8x128xf32>
    %209 = math.exp %208 : vector<8x128xf32>
    %cst_68 = arith.constant 1.000000e+00 : f32
    %210 = vector.broadcast %cst_68 : f32 to vector<8x128xf32>
    %211 = arith.addf %210, %209 : vector<8x128xf32>
    %212 = arith.divf %210, %211 : vector<8x128xf32>
    %213 = arith.mulf %206, %200 : vector<8x128xf32>
    %214 = arith.addf %197, %213 : vector<8x128xf32>
    %215 = math.tanh %214 : vector<8x128xf32>
    %cst_69 = arith.constant 1.000000e+00 : f32
    %216 = vector.broadcast %cst_69 : f32 to vector<8x128xf32>
    %217 = arith.subf %216, %212 : vector<8x128xf32>
    %218 = arith.mulf %217, %215 : vector<8x128xf32>
    %219 = arith.mulf %212, %185 : vector<8x128xf32>
    %220 = arith.addf %218, %219 : vector<8x128xf32>
    %c6_i32 = arith.constant 6 : i32
    %c8_i32_70 = arith.constant 8 : i32
    %221 = arith.muli %c6_i32, %c8_i32_70 : i32
    %222 = tpu.assume_multiple %221, 8 : i32
    %223 = arith.index_cast %222 : i32 to index
    %c0_71 = arith.constant 0 : index
    %224 = vector.load %arg14[%223, %c0_71] : memref<64x384xf32, #tpu.memory_space<vmem>>, vector<8x384xf32>
    %c0_72 = arith.constant 0 : index
    %c0_73 = arith.constant 0 : index
    %225 = vector.load %arg3[%c0_72, %c0_73] : memref<128x384xf32, #tpu.memory_space<vmem>>, vector<128x384xf32>
    %cst_74 = arith.constant dense<0.000000e+00> : vector<8x384xf32>
    %226 = tpu.matmul %220, %225, %cst_74 {dimension_numbers = #tpu.dot_dimension_numbers<[1], [0], [0], [1], [0, 0, 1, 1], [], []>} : vector<8x128xf32>, vector<128x384xf32>, vector<8x384xf32> -> vector<8x384xf32>
    %c0_75 = arith.constant 0 : index
    %c0_76 = arith.constant 0 : index
    %227 = vector.load %arg5[%c0_75, %c0_76] : memref<1x384xf32, #tpu.memory_space<vmem>>, vector<1x384xf32>
    %228 = vector.broadcast %227 : vector<1x384xf32> to vector<8x384xf32>
    %229 = arith.addf %226, %228 : vector<8x384xf32>
    %230 = vector.extract_strided_slice %224 {offsets = [0, 0], sizes = [8, 128], strides = [1, 1]} : vector<8x384xf32> to vector<8x128xf32>
    %231 = vector.extract_strided_slice %224 {offsets = [0, 128], sizes = [8, 128], strides = [1, 1]} : vector<8x384xf32> to vector<8x128xf32>
    %232 = vector.extract_strided_slice %224 {offsets = [0, 256], sizes = [8, 128], strides = [1, 1]} : vector<8x384xf32> to vector<8x128xf32>
    %233 = vector.extract_strided_slice %229 {offsets = [0, 0], sizes = [8, 128], strides = [1, 1]} : vector<8x384xf32> to vector<8x128xf32>
    %234 = vector.extract_strided_slice %229 {offsets = [0, 128], sizes = [8, 128], strides = [1, 1]} : vector<8x384xf32> to vector<8x128xf32>
    %235 = vector.extract_strided_slice %229 {offsets = [0, 256], sizes = [8, 128], strides = [1, 1]} : vector<8x384xf32> to vector<8x128xf32>
    %236 = arith.addf %230, %233 : vector<8x128xf32>
    %237 = arith.negf %236 : vector<8x128xf32>
    %238 = math.exp %237 : vector<8x128xf32>
    %cst_77 = arith.constant 1.000000e+00 : f32
    %239 = vector.broadcast %cst_77 : f32 to vector<8x128xf32>
    %240 = arith.addf %239, %238 : vector<8x128xf32>
    %241 = arith.divf %239, %240 : vector<8x128xf32>
    %242 = arith.addf %231, %234 : vector<8x128xf32>
    %243 = arith.negf %242 : vector<8x128xf32>
    %244 = math.exp %243 : vector<8x128xf32>
    %cst_78 = arith.constant 1.000000e+00 : f32
    %245 = vector.broadcast %cst_78 : f32 to vector<8x128xf32>
    %246 = arith.addf %245, %244 : vector<8x128xf32>
    %247 = arith.divf %245, %246 : vector<8x128xf32>
    %248 = arith.mulf %241, %235 : vector<8x128xf32>
    %249 = arith.addf %232, %248 : vector<8x128xf32>
    %250 = math.tanh %249 : vector<8x128xf32>
    %cst_79 = arith.constant 1.000000e+00 : f32
    %251 = vector.broadcast %cst_79 : f32 to vector<8x128xf32>
    %252 = arith.subf %251, %247 : vector<8x128xf32>
    %253 = arith.mulf %252, %250 : vector<8x128xf32>
    %254 = arith.mulf %247, %220 : vector<8x128xf32>
    %255 = arith.addf %253, %254 : vector<8x128xf32>
    %c7_i32 = arith.constant 7 : i32
    %c8_i32_80 = arith.constant 8 : i32
    %256 = arith.muli %c7_i32, %c8_i32_80 : i32
    %257 = tpu.assume_multiple %256, 8 : i32
    %258 = arith.index_cast %257 : i32 to index
    %c0_81 = arith.constant 0 : index
    %259 = vector.load %arg14[%258, %c0_81] : memref<64x384xf32, #tpu.memory_space<vmem>>, vector<8x384xf32>
    %c0_82 = arith.constant 0 : index
    %c0_83 = arith.constant 0 : index
    %260 = vector.load %arg3[%c0_82, %c0_83] : memref<128x384xf32, #tpu.memory_space<vmem>>, vector<128x384xf32>
    %cst_84 = arith.constant dense<0.000000e+00> : vector<8x384xf32>
    %261 = tpu.matmul %255, %260, %cst_84 {dimension_numbers = #tpu.dot_dimension_numbers<[1], [0], [0], [1], [0, 0, 1, 1], [], []>} : vector<8x128xf32>, vector<128x384xf32>, vector<8x384xf32> -> vector<8x384xf32>
    %c0_85 = arith.constant 0 : index
    %c0_86 = arith.constant 0 : index
    %262 = vector.load %arg5[%c0_85, %c0_86] : memref<1x384xf32, #tpu.memory_space<vmem>>, vector<1x384xf32>
    %263 = vector.broadcast %262 : vector<1x384xf32> to vector<8x384xf32>
    %264 = arith.addf %261, %263 : vector<8x384xf32>
    %265 = vector.extract_strided_slice %259 {offsets = [0, 0], sizes = [8, 128], strides = [1, 1]} : vector<8x384xf32> to vector<8x128xf32>
    %266 = vector.extract_strided_slice %259 {offsets = [0, 128], sizes = [8, 128], strides = [1, 1]} : vector<8x384xf32> to vector<8x128xf32>
    %267 = vector.extract_strided_slice %259 {offsets = [0, 256], sizes = [8, 128], strides = [1, 1]} : vector<8x384xf32> to vector<8x128xf32>
    %268 = vector.extract_strided_slice %264 {offsets = [0, 0], sizes = [8, 128], strides = [1, 1]} : vector<8x384xf32> to vector<8x128xf32>
    %269 = vector.extract_strided_slice %264 {offsets = [0, 128], sizes = [8, 128], strides = [1, 1]} : vector<8x384xf32> to vector<8x128xf32>
    %270 = vector.extract_strided_slice %264 {offsets = [0, 256], sizes = [8, 128], strides = [1, 1]} : vector<8x384xf32> to vector<8x128xf32>
    %271 = arith.addf %265, %268 : vector<8x128xf32>
    %272 = arith.negf %271 : vector<8x128xf32>
    %273 = math.exp %272 : vector<8x128xf32>
    %cst_87 = arith.constant 1.000000e+00 : f32
    %274 = vector.broadcast %cst_87 : f32 to vector<8x128xf32>
    %275 = arith.addf %274, %273 : vector<8x128xf32>
    %276 = arith.divf %274, %275 : vector<8x128xf32>
    %277 = arith.addf %266, %269 : vector<8x128xf32>
    %278 = arith.negf %277 : vector<8x128xf32>
    %279 = math.exp %278 : vector<8x128xf32>
    %cst_88 = arith.constant 1.000000e+00 : f32
    %280 = vector.broadcast %cst_88 : f32 to vector<8x128xf32>
    %281 = arith.addf %280, %279 : vector<8x128xf32>
    %282 = arith.divf %280, %281 : vector<8x128xf32>
    %283 = arith.mulf %276, %270 : vector<8x128xf32>
    %284 = arith.addf %267, %283 : vector<8x128xf32>
    %285 = math.tanh %284 : vector<8x128xf32>
    %cst_89 = arith.constant 1.000000e+00 : f32
    %286 = vector.broadcast %cst_89 : f32 to vector<8x128xf32>
    %287 = arith.subf %286, %282 : vector<8x128xf32>
    %288 = arith.mulf %287, %285 : vector<8x128xf32>
    %289 = arith.mulf %282, %255 : vector<8x128xf32>
    %290 = arith.addf %288, %289 : vector<8x128xf32>
    %c8_i32_90 = arith.constant 8 : i32
    %c0_91 = arith.constant 0 : index
    %c0_92 = arith.constant 0 : index
    %291 = vector.load %arg13[%c0_91, %c0_92] : memref<8x128xf32, #tpu.memory_space<vmem>>, vector<8x128xf32>
    tpu.vector_store %arg13[%c0_91, %c0_92], %290 {strides = array<i32>} : memref<8x128xf32, #tpu.memory_space<vmem>>, vector<8x128xf32>,
    %c0_i32_93 = arith.constant 0 : i32
    %292 = arith.cmpi eq, %arg0, %c0_i32_93 : i32
    %293 = arith.extui %292 : i1 to i32
    %c0_i32_94 = arith.constant 0 : i32
    %294 = arith.cmpi ne, %293, %c0_i32_94 : i32
    scf.if %294 {
      %c0_95 = arith.constant 0 : index
      %c0_96 = arith.constant 0 : index
      %295 = vector.load %arg8[%c0_95, %c0_96] : memref<1x128xf32, #tpu.memory_space<vmem>>, vector<1x128xf32>
      %296 = vector.broadcast %295 : vector<1x128xf32> to vector<8x128xf32>
      %297 = arith.subf %290, %296 : vector<8x128xf32>
      %c0_97 = arith.constant 0 : index
      %c0_98 = arith.constant 0 : index
      %298 = vector.load %arg9[%c0_97, %c0_98] : memref<1x128xf32, #tpu.memory_space<vmem>>, vector<1x128xf32>
      %cst_99 = arith.constant 9.99999974E-6 : f32
      %299 = vector.broadcast %cst_99 : f32 to vector<1x128xf32>
      %300 = arith.addf %298, %299 : vector<1x128xf32>
      %301 = math.rsqrt %300 : vector<1x128xf32>
      %302 = vector.broadcast %301 : vector<1x128xf32> to vector<8x128xf32>
      %303 = arith.mulf %297, %302 : vector<8x128xf32>
      %c0_100 = arith.constant 0 : index
      %c0_101 = arith.constant 0 : index
      %304 = vector.load %arg6[%c0_100, %c0_101] : memref<1x128xf32, #tpu.memory_space<vmem>>, vector<1x128xf32>
      %305 = vector.broadcast %304 : vector<1x128xf32> to vector<8x128xf32>
      %306 = arith.mulf %303, %305 : vector<8x128xf32>
      %c0_102 = arith.constant 0 : index
      %c0_103 = arith.constant 0 : index
      %307 = vector.load %arg7[%c0_102, %c0_103] : memref<1x128xf32, #tpu.memory_space<vmem>>, vector<1x128xf32>
      %308 = vector.broadcast %307 : vector<1x128xf32> to vector<8x128xf32>
      %309 = arith.addf %306, %308 : vector<8x128xf32>
      %cst_104 = arith.constant 0.000000e+00 : f32
      %310 = vector.broadcast %cst_104 : f32 to vector<8x128xf32>
      %311 = arith.maximumf %309, %310 : vector<8x128xf32>
      %c0_105 = arith.constant 0 : index
      %c0_106 = arith.constant 0 : index
      %312 = vector.load %arg10[%c0_105, %c0_106] : memref<128x5xf32, #tpu.memory_space<vmem>>, vector<128x5xf32>
      %cst_107 = arith.constant dense<0.000000e+00> : vector<8x5xf32>
      %313 = tpu.matmul %311, %312, %cst_107 {dimension_numbers = #tpu.dot_dimension_numbers<[1], [0], [0], [1], [0, 0, 1, 1], [], []>} : vector<8x128xf32>, vector<128x5xf32>, vector<8x5xf32> -> vector<8x5xf32>
      %c0_108 = arith.constant 0 : index
      %c0_109 = arith.constant 0 : index
      %314 = vector.load %arg11[%c0_108, %c0_109] : memref<1x5xf32, #tpu.memory_space<vmem>>, vector<1x5xf32>
      %315 = vector.broadcast %314 : vector<1x5xf32> to vector<8x5xf32>
      %316 = arith.addf %313, %315 : vector<8x5xf32>
      %c0_110 = arith.constant 0 : index
      %c0_111 = arith.constant 0 : index
      %317 = vector.load %arg12[%c0_110, %c0_111] : memref<8x5xf32, #tpu.memory_space<vmem>>, vector<8x5xf32>
      tpu.vector_store %arg12[%c0_110, %c0_111], %316 {strides = array<i32>} : memref<8x5xf32, #tpu.memory_space<vmem>>, vector<8x5xf32>,
    } else {
    }
    return
  }
  func.func @transform_0(%arg0: i32) -> (i32, i32) {
    %c0_i32 = arith.constant 0 : i32
    %c0_i32_0 = arith.constant 0 : i32
    return %arg0, %c0_i32 : i32, i32
  }
  func.func @transform_1(%arg0: i32) -> (i32, i32) {
    %c0_i32 = arith.constant 0 : i32
    %c0_i32_0 = arith.constant 0 : i32
    %c0_i32_1 = arith.constant 0 : i32
    return %c0_i32, %c0_i32_0 : i32, i32
  }
  func.func @transform_2(%arg0: i32) -> (i32, i32) {
    %c0_i32 = arith.constant 0 : i32
    %c0_i32_0 = arith.constant 0 : i32
    %c0_i32_1 = arith.constant 0 : i32
    return %c0_i32, %c0_i32_0 : i32, i32
  }
  func.func @transform_3(%arg0: i32) -> (i32, i32) {
    %c0_i32 = arith.constant 0 : i32
    %c0_i32_0 = arith.constant 0 : i32
    %c0_i32_1 = arith.constant 0 : i32
    return %c0_i32, %c0_i32_0 : i32, i32
  }
  func.func @transform_4(%arg0: i32) -> (i32, i32) {
    %c0_i32 = arith.constant 0 : i32
    %c0_i32_0 = arith.constant 0 : i32
    %c0_i32_1 = arith.constant 0 : i32
    return %c0_i32, %c0_i32_0 : i32, i32
  }
  func.func @transform_5(%arg0: i32) -> (i32, i32) {
    %c0_i32 = arith.constant 0 : i32
    %c0_i32_0 = arith.constant 0 : i32
    %c0_i32_1 = arith.constant 0 : i32
    return %c0_i32, %c0_i32_0 : i32, i32
  }
  func.func @transform_6(%arg0: i32) -> (i32, i32) {
    %c0_i32 = arith.constant 0 : i32
    %c0_i32_0 = arith.constant 0 : i32
    %c0_i32_1 = arith.constant 0 : i32
    return %c0_i32, %c0_i32_0 : i32, i32
  }
  func.func @transform_7(%arg0: i32) -> (i32, i32) {
    %c0_i32 = arith.constant 0 : i32
    %c0_i32_0 = arith.constant 0 : i32
    %c0_i32_1 = arith.constant 0 : i32
    return %c0_i32, %c0_i32_0 : i32, i32
  }
  func.func @transform_8(%arg0: i32) -> (i32, i32) {
    %c0_i32 = arith.constant 0 : i32
    %c0_i32_0 = arith.constant 0 : i32
    %c0_i32_1 = arith.constant 0 : i32
    return %c0_i32, %c0_i32_0 : i32, i32
  }
  func.func @transform_9(%arg0: i32) -> (i32, i32) {
    %c0_i32 = arith.constant 0 : i32
    %c0_i32_0 = arith.constant 0 : i32
    %c0_i32_1 = arith.constant 0 : i32
    return %c0_i32, %c0_i32_0 : i32, i32
  }
  func.func @transform_10(%arg0: i32) -> (i32, i32) {
    %c0_i32 = arith.constant 0 : i32
    %c0_i32_0 = arith.constant 0 : i32
    %c0_i32_1 = arith.constant 0 : i32
    return %c0_i32, %c0_i32_0 : i32, i32
  }
  func.func @transform_11(%arg0: i32) -> (i32, i32) {
    %c0_i32 = arith.constant 0 : i32
    %c0_i32_0 = arith.constant 0 : i32
    %c0_i32_1 = arith.constant 0 : i32
    return %c0_i32, %c0_i32_0 : i32, i32
  }
}

</mosaic_0001>

<llo_original>
// kernel: lstm_classifier_forward.1
$region0: #{lstm_classifier_forward.1}
  #allocation0 [shape = 'u32[]', space=smem, size = 0x4, offset = 0x4, fixed_abs, tag = 'smem constant byte address 0x4 - core index']
  #allocation1 [shape = 'u32[144,128]{1,0:T(1,128)}', space=vmem, size = 0x12000, scoped, tag = 'internal scratch']
  #allocation2 [shape = 'f32[8,128]{1,0:T(8,128)}', space=vmem, size = 0x1000, scoped, tag = 'scratch operand']
  #allocation3 [shape = 'f32[64,384]{1,0:T(8,128)}', space=vmem, size = 0x18000, scoped, tag = 'scratch operand']
  %s0 = inlined_call_operand.vmem [shape: f32[64,4], index: 0, kind: input, shape index: {}]
  %s1 = inlined_call_operand.vmem [shape: f32[4,384], index: 1, kind: input, shape index: {}]
  %s2 = inlined_call_operand.vmem [shape: f32[128,384], index: 2, kind: input, shape index: {}]
  %s3 = inlined_call_operand.vmem [shape: f32[1,384], index: 3, kind: input, shape index: {}]
  %s4 = inlined_call_operand.vmem [shape: f32[1,384], index: 4, kind: input, shape index: {}]
  %s5 = inlined_call_operand.vmem [shape: f32[1,128], index: 5, kind: input, shape index: {}]
  %s6 = inlined_call_operand.vmem [shape: f32[1,128], index: 6, kind: input, shape index: {}]
  %s7 = inlined_call_operand.vmem [shape: f32[1,128], index: 7, kind: input, shape index: {}]
  %s8 = inlined_call_operand.vmem [shape: f32[1,128], index: 8, kind: input, shape index: {}]
  %s9 = inlined_call_operand.vmem [shape: f32[128,5], index: 9, kind: input, shape index: {}]
  %s10 = inlined_call_operand.vmem [shape: f32[1,5], index: 10, kind: input, shape index: {}]
  %s11 = inlined_call_operand.vmem [shape: f32[8,5], index: 11, kind: output, shape index: {}]
  %s12 = sld [smem:[#allocation0]]
  $region62: #{lstm_classifier_forward.1} parent=0
    _
  %s14 = ssub.s32 1, %s12
  %s15 = scalar_select 0, %s14, %s12
  // Predicated region
  $region2: #{lstm_classifier_forward.1} parent=0 // pred_check
    _
  $region3: #{lstm_classifier_forward.1} parent=0 // pred_check_branch
    %17 = sbr.rel (0) target = $region5
  $region4: #{lstm_classifier_forward.1} parent=0 // pred_region
    _
  $region5: #{lstm_classifier_forward.1} parent=0 // pred_fallthru
    _
  // Predicated region
  $region6: #{lstm_classifier_forward.1} parent=0 // pred_check
    _
  $region7: #{lstm_classifier_forward.1} parent=0 // pred_check_branch
    %19 = sbr.rel (0) target = $region9
  $region8: #{lstm_classifier_forward.1} parent=0 // pred_region
    _
  $region9: #{lstm_classifier_forward.1} parent=0 // pred_fallthru
    _
  // Predicated region
  $region10: #{lstm_classifier_forward.1} parent=0 // pred_check
    _
  $region11: #{lstm_classifier_forward.1} parent=0 // pred_check_branch
    %21 = sbr.rel (0) target = $region13
  $region12: #{lstm_classifier_forward.1} parent=0 // pred_region
    _
  $region13: #{lstm_classifier_forward.1} parent=0 // pred_fallthru
    _
  // Predicated region
  $region14: #{lstm_classifier_forward.1} parent=0 // pred_check
    _
  $region15: #{lstm_classifier_forward.1} parent=0 // pred_check_branch
    %23 = sbr.rel (0) target = $region17
  $region16: #{lstm_classifier_forward.1} parent=0 // pred_region
    _
  $region17: #{lstm_classifier_forward.1} parent=0 // pred_fallthru
    _
  // Predicated region
  $region18: #{lstm_classifier_forward.1} parent=0 // pred_check
    _
  $region19: #{lstm_classifier_forward.1} parent=0 // pred_check_branch
    %25 = sbr.rel (0) target = $region21
  $region20: #{lstm_classifier_forward.1} parent=0 // pred_region
    _
  $region21: #{lstm_classifier_forward.1} parent=0 // pred_fallthru
    _
  // Predicated region
  $region22: #{lstm_classifier_forward.1} parent=0 // pred_check
    _
  $region23: #{lstm_classifier_forward.1} parent=0 // pred_check_branch
    %27 = sbr.rel (0) target = $region25
  $region24: #{lstm_classifier_forward.1} parent=0 // pred_region
    _
  $region25: #{lstm_classifier_forward.1} parent=0 // pred_fallthru
    _
  // Predicated region
  $region26: #{lstm_classifier_forward.1} parent=0 // pred_check
    _
  $region27: #{lstm_classifier_forward.1} parent=0 // pred_check_branch
    %29 = sbr.rel (0) target = $region29
  $region28: #{lstm_classifier_forward.1} parent=0 // pred_region
    _
  $region29: #{lstm_classifier_forward.1} parent=0 // pred_fallthru
    _
  // Predicated region
  $region30: #{lstm_classifier_forward.1} parent=0 // pred_check
    _
  $region31: #{lstm_classifier_forward.1} parent=0 // pred_check_branch
    %31 = sbr.rel (0) target = $region33
  $region32: #{lstm_classifier_forward.1} parent=0 // pred_region
    _
  $region33: #{lstm_classifier_forward.1} parent=0 // pred_fallthru
    _
  // Predicated region
  $region34: #{lstm_classifier_forward.1} parent=0 // pred_check
    _
  $region35: #{lstm_classifier_forward.1} parent=0 // pred_check_branch
    %33 = sbr.rel (0) target = $region37
  $region36: #{lstm_classifier_forward.1} parent=0 // pred_region
    _
  $region37: #{lstm_classifier_forward.1} parent=0 // pred_fallthru
    _
  // Predicated region
  $region38: #{lstm_classifier_forward.1} parent=0 // pred_check
    _
  $region39: #{lstm_classifier_forward.1} parent=0 // pred_check_branch
    %35 = sbr.rel (0) target = $region41
  $region40: #{lstm_classifier_forward.1} parent=0 // pred_region
    _
  $region41: #{lstm_classifier_forward.1} parent=0 // pred_fallthru
    _
  // Predicated region
  $region42: #{lstm_classifier_forward.1} parent=0 // pred_check
    _
  $region43: #{lstm_classifier_forward.1} parent=0 // pred_check_branch
    %37 = sbr.rel (0) target = $region45
  $region44: #{lstm_classifier_forward.1} parent=0 // pred_region
    _
  $region45: #{lstm_classifier_forward.1} parent=0 // pred_fallthru
    _
  %p38 = scmp.eq.s32.totalorder 0, 0
  // Predicated region
  $region46: #{lstm_classifier_forward.1} parent=0 // pred_check
    %p39 = pneg %p38
  $region47: #{lstm_classifier_forward.1} parent=0 // pred_check_branch
    %41 = sbr.rel (%p39) target = $region49
  $region48: #{lstm_classifier_forward.1} parent=0 // pred_region
    %42 = vst [vmem:[#allocation2] sm:$0xff] 0.0
  $region49: #{lstm_classifier_forward.1} parent=0 // pred_fallthru
    _
  %v43 = vld [vmem:[%s0] sm:$0xff]
  %v44 = vld [vmem:[%s0 + $0x8] sm:$0xff]
  %v45 = vld [vmem:[%s0 + $0x10] sm:$0xff]
  %v46 = vld [vmem:[%s0 + $0x18] sm:$0xff]
  %v47 = vld [vmem:[%s0 + $0x20] sm:$0xff]
  %v48 = vld [vmem:[%s0 + $0x28] sm:$0xff]
  %v49 = vld [vmem:[%s0 + $0x30] sm:$0xff]
  %v50 = vld [vmem:[%s0 + $0x38] sm:$0xff]
  %v51 = vld [vmem:[%s1] sm:$0xff]
  %v52 = vld [vmem:[%s1 + $0x8] sm:$0xf]
  %v53 = vld [vmem:[%s3] sm:$0x7]
  %v55 = vlaneseq
  %v56 = vshrl.u32 %v55, 7
  %v57 = vsub.s32 0, %v56
  %v58 = vrot.slane %v53, %v57
  %v59 = vlaneseq
  %v60 = vshrl.u32 %v59, 7
  %v61 = vsub.s32 1, %v60
  %v62 = vrot.slane %v53, %v61
  %v63 = vlaneseq
  %v64 = vshrl.u32 %v63, 7
  %v65 = vsub.s32 2, %v64
  %v66 = vrot.slane %v53, %v65
  %v72 = vcombine.high %v51, %v51
  %vm73 = vcmask 31744
  %v75 = vsel %vm73, %v43, 0
  %v78 = vsel %vm73, %v44, 0
  %v81 = vsel %vm73, %v45, 0
  %v84 = vsel %vm73, %v46, 0
  %v87 = vsel %vm73, %v47, 0
  %v90 = vsel %vm73, %v48, 0
  %v93 = vsel %vm73, %v49, 0
  %v96 = vsel %vm73, %v50, 0
  %vm98 = vcmask 1043456
  %v99 = vsel %vm98, %v51, 0
  %v101 = vsel %vm98, %v72, 0
  %v103 = vsel %vm98, %v52, 0
  %105 = vmatprep.subr.mxu0 %v101
  %106 = vmatpush1.msra.mxu0 %v99
  %107 = vmatprep.subr.mxu0 0.0
  %108 = vmatpush1.msra.mxu0 0.0
  %109 = vmatprep.subr.mxu0 0.0
  %110 = vmatpush1.msra.mxu0 0.0
  %111 = vmatprep.subr.mxu0 0.0
  %112 = vmatpush1.msra.mxu0 0.0
  %113 = vmatprep.subr.mxu0 0.0
  %114 = vmatpush1.msra.mxu0 0.0
  %115 = vmatprep.subr.mxu0 0.0
  %116 = vmatpush1.msra.mxu0 0.0
  %117 = vmatprep.subr.mxu0 0.0
  %118 = vmatpush1.msra.mxu0 0.0
  %119 = vmatprep.subr.mxu0 0.0
  %120 = vmatpush1.msra.mxu0 0.0
  %121 = vmatprep.subr.mxu0 0.0
  %122 = vmatpush1.msra.mxu0 0.0
  %123 = vmatprep.subr.mxu0 0.0
  %124 = vmatpush1.msra.mxu0 0.0
  %125 = vmatprep.subr.mxu0 0.0
  %126 = vmatpush1.msra.mxu0 0.0
  %127 = vmatprep.subr.mxu0 0.0
  %128 = vmatpush1.msra.mxu0 0.0
  %129 = vmatprep.subr.mxu0 0.0
  %130 = vmatpush1.msra.mxu0 0.0
  %131 = vmatprep.subr.mxu0 0.0
  %132 = vmatpush1.msra.mxu0 0.0
  %133 = vmatprep.subr.mxu0 0.0
  %134 = vmatpush1.msra.mxu0 0.0
  %135 = vmatprep.subr.mxu0 0.0
  %136 = vmatpush1.msra.mxu0 0.0
  %137 = vmatprep.subr.mxu0 0.0
  %138 = vmatpush1.msra.mxu0 0.0
  %139 = vmatprep.subr.mxu0 0.0
  %140 = vmatpush1.msra.mxu0 0.0
  %141 = vmatprep.subr.mxu0 0.0
  %142 = vmatpush1.msra.mxu0 0.0
  %143 = vmatprep.subr.mxu0 0.0
  %144 = vmatpush1.msra.mxu0 0.0
  %145 = vmatprep.subr.mxu0 0.0
  %146 = vmatpush1.msra.mxu0 0.0
  %147 = vmatprep.subr.mxu0 0.0
  %148 = vmatpush1.msra.mxu0 0.0
  %149 = vmatprep.subr.mxu0 0.0
  %150 = vmatpush1.msra.mxu0 0.0
  %151 = vmatprep.subr.mxu0 0.0
  %152 = vmatpush1.msra.mxu0 0.0
  %153 = vmatprep.subr.mxu0 0.0
  %154 = vmatpush1.msra.mxu0 0.0
  %155 = vmatprep.subr.mxu0 0.0
  %156 = vmatpush1.msra.mxu0 0.0
  %157 = vmatprep.subr.mxu0 0.0
  %158 = vmatpush1.msra.mxu0 0.0
  %159 = vmatprep.subr.mxu0 0.0
  %160 = vmatpush1.msra.mxu0 0.0
  %161 = vmatprep.subr.mxu0 0.0
  %162 = vmatpush1.msra.mxu0 0.0
  %163 = vmatprep.subr.mxu0 0.0
  %164 = vmatpush1.msra.mxu0 0.0
  %165 = vmatprep.subr.mxu0 0.0
  %166 = vmatpush1.msra.mxu0 0.0
  %167 = vmatprep.subr.mxu0 0.0
  %168 = vmatpush1.msra.mxu0 0.0
  %169 = vmatprep.mubr.f32.mxu0 0.0
  %170 = vmatmul.mubr.f32.gmra.mrb[0].mxu0 %v75
  %v171 = vpop.f32.mrb[0].mxu0
  %v172 = vadd.f32 %v58, %v171
  %v173 = vpop.f32.mrb[0].mxu0
  %v174 = vadd.f32 %v62, %v173
  %175 = vmatprep.mubr.f32.mxu0 0.0
  %176 = vmatmul.mubr.f32.gmra.mrb[0].mxu0 %v78
  %v177 = vpop.f32.mrb[0].mxu0
  %v178 = vadd.f32 %v58, %v177
  %v179 = vpop.f32.mrb[0].mxu0
  %v180 = vadd.f32 %v62, %v179
  %181 = vmatprep.mubr.f32.mxu0 0.0
  %182 = vmatmul.mubr.f32.gmra.mrb[0].mxu0 %v81
  %v183 = vpop.f32.mrb[0].mxu0
  %v184 = vadd.f32 %v58, %v183
  %v185 = vpop.f32.mrb[0].mxu0
  %v186 = vadd.f32 %v62, %v185
  %187 = vmatprep.mubr.f32.mxu0 0.0
  %188 = vmatmul.mubr.f32.gmra.mrb[0].mxu0 %v84
  %v189 = vpop.f32.mrb[0].mxu0
  %v190 = vadd.f32 %v58, %v189
  %v191 = vpop.f32.mrb[0].mxu0
  %v192 = vadd.f32 %v62, %v191
  %193 = vmatprep.mubr.f32.mxu0 0.0
  %194 = vmatmul.mubr.f32.gmra.mrb[0].mxu0 %v87
  %v195 = vpop.f32.mrb[0].mxu0
  %v196 = vadd.f32 %v58, %v195
  %v197 = vpop.f32.mrb[0].mxu0
  %v198 = vadd.f32 %v62, %v197
  %199 = vmatprep.mubr.f32.mxu0 0.0
  %200 = vmatmul.mubr.f32.gmra.mrb[0].mxu0 %v90
  %v201 = vpop.f32.mrb[0].mxu0
  %v202 = vadd.f32 %v58, %v201
  %v203 = vpop.f32.mrb[0].mxu0
  %v204 = vadd.f32 %v62, %v203
  %205 = vmatprep.mubr.f32.mxu0 0.0
  %206 = vmatmul.mubr.f32.gmra.mrb[0].mxu0 %v93
  %v207 = vpop.f32.mrb[0].mxu0
  %v208 = vadd.f32 %v58, %v207
  %v209 = vpop.f32.mrb[0].mxu0
  %v210 = vadd.f32 %v62, %v209
  %211 = vmatprep.mubr.f32.mxu0 0.0
  %212 = vmatmul.mubr.f32.gmra.mrb[0].mxu0 %v96
  %v213 = vpop.f32.mrb[0].mxu0
  %v214 = vadd.f32 %v58, %v213
  %v215 = vpop.f32.mrb[0].mxu0
  %v216 = vadd.f32 %v62, %v215
  %217 = vdwg.mxu0
  %218 = vmatprep.subr.mxu0 0.0
  %219 = vmatpush1.msra.mxu0 %v103
  %220 = vmatprep.subr.mxu0 0.0
  %221 = vmatpush1.msra.mxu0 0.0
  %222 = vmatprep.subr.mxu0 0.0
  %223 = vmatpush1.msra.mxu0 0.0
  %224 = vmatprep.subr.mxu0 0.0
  %225 = vmatpush1.msra.mxu0 0.0
  %226 = vmatprep.subr.mxu0 0.0
  %227 = vmatpush1.msra.mxu0 0.0
  %228 = vmatprep.subr.mxu0 0.0
  %229 = vmatpush1.msra.mxu0 0.0
  %230 = vmatprep.subr.mxu0 0.0
  %231 = vmatpush1.msra.mxu0 0.0
  %232 = vmatprep.subr.mxu0 0.0
  %233 = vmatpush1.msra.mxu0 0.0
  %234 = vmatprep.subr.mxu0 0.0
  %235 = vmatpush1.msra.mxu0 0.0
  %236 = vmatprep.subr.mxu0 0.0
  %237 = vmatpush1.msra.mxu0 0.0
  %238 = vmatprep.subr.mxu0 0.0
  %239 = vmatpush1.msra.mxu0 0.0
  %240 = vmatprep.subr.mxu0 0.0
  %241 = vmatpush1.msra.mxu0 0.0
  %242 = vmatprep.subr.mxu0 0.0
  %243 = vmatpush1.msra.mxu0 0.0
  %244 = vmatprep.subr.mxu0 0.0
  %245 = vmatpush1.msra.mxu0 0.0
  %246 = vmatprep.subr.mxu0 0.0
  %247 = vmatpush1.msra.mxu0 0.0
  %248 = vmatprep.subr.mxu0 0.0
  %249 = vmatpush1.msra.mxu0 0.0
  %250 = vmatprep.subr.mxu0 0.0
  %251 = vmatpush1.msra.mxu0 0.0
  %252 = vmatprep.subr.mxu0 0.0
  %253 = vmatpush1.msra.mxu0 0.0
  %254 = vmatprep.subr.mxu0 0.0
  %255 = vmatpush1.msra.mxu0 0.0
  %256 = vmatprep.subr.mxu0 0.0
  %257 = vmatpush1.msra.mxu0 0.0
  %258 = vmatprep.subr.mxu0 0.0
  %259 = vmatpush1.msra.mxu0 0.0
  %260 = vmatprep.subr.mxu0 0.0
  %261 = vmatpush1.msra.mxu0 0.0
  %262 = vmatprep.subr.mxu0 0.0
  %263 = vmatpush1.msra.mxu0 0.0
  %264 = vmatprep.subr.mxu0 0.0
  %265 = vmatpush1.msra.mxu0 0.0
  %266 = vmatprep.subr.mxu0 0.0
  %267 = vmatpush1.msra.mxu0 0.0
  %268 = vmatprep.subr.mxu0 0.0
  %269 = vmatpush1.msra.mxu0 0.0
  %270 = vmatprep.subr.mxu0 0.0
  %271 = vmatpush1.msra.mxu0 0.0
  %272 = vmatprep.subr.mxu0 0.0
  %273 = vmatpush1.msra.mxu0 0.0
  %274 = vmatprep.subr.mxu0 0.0
  %275 = vmatpush1.msra.mxu0 0.0
  %276 = vmatprep.subr.mxu0 0.0
  %277 = vmatpush1.msra.mxu0 0.0
  %278 = vmatprep.subr.mxu0 0.0
  %279 = vmatpush1.msra.mxu0 0.0
  %280 = vmatprep.subr.mxu0 0.0
  %281 = vmatpush1.msra.mxu0 0.0
  %282 = vmatprep.mubr.f32.mxu0 0.0
  %283 = vmatmul.mubr.f32.gmra.mrb[0].mxu0 %v75
  %v284 = vpop.f32.mrb[0].mxu0
  %v285 = vadd.f32 %v66, %v284
  %v286 = vpop.f32.mrb[0].mxu0
  %287 = vmatprep.mubr.f32.mxu0 0.0
  %288 = vmatmul.mubr.f32.gmra.mrb[0].mxu0 %v78
  %v289 = vpop.f32.mrb[0].mxu0
  %v290 = vadd.f32 %v66, %v289
  %v291 = vpop.f32.mrb[0].mxu0
  %292 = vmatprep.mubr.f32.mxu0 0.0
  %293 = vmatmul.mubr.f32.gmra.mrb[0].mxu0 %v81
  %v294 = vpop.f32.mrb[0].mxu0
  %v295 = vadd.f32 %v66, %v294
  %v296 = vpop.f32.mrb[0].mxu0
  %297 = vmatprep.mubr.f32.mxu0 0.0
  %298 = vmatmul.mubr.f32.gmra.mrb[0].mxu0 %v84
  %v299 = vpop.f32.mrb[0].mxu0
  %v300 = vadd.f32 %v66, %v299
  %v301 = vpop.f32.mrb[0].mxu0
  %302 = vmatprep.mubr.f32.mxu0 0.0
  %303 = vmatmul.mubr.f32.gmra.mrb[0].mxu0 %v87
  %v304 = vpop.f32.mrb[0].mxu0
  %v305 = vadd.f32 %v66, %v304
  %v306 = vpop.f32.mrb[0].mxu0
  %307 = vmatprep.mubr.f32.mxu0 0.0
  %308 = vmatmul.mubr.f32.gmra.mrb[0].mxu0 %v90
  %v309 = vpop.f32.mrb[0].mxu0
  %v310 = vadd.f32 %v66, %v309
  %v311 = vpop.f32.mrb[0].mxu0
  %312 = vmatprep.mubr.f32.mxu0 0.0
  %313 = vmatmul.mubr.f32.gmra.mrb[0].mxu0 %v93
  %v314 = vpop.f32.mrb[0].mxu0
  %v315 = vadd.f32 %v66, %v314
  %v316 = vpop.f32.mrb[0].mxu0
  %317 = vmatprep.mubr.f32.mxu0 0.0
  %318 = vmatmul.mubr.f32.gmra.mrb[0].mxu0 %v96
  %v319 = vpop.f32.mrb[0].mxu0
  %v320 = vadd.f32 %v66, %v319
  %v321 = vpop.f32.mrb[0].mxu0
  %322 = vdwg.mxu0
  %323 = vst [vmem:[#allocation3] sm:$0xff] %v172
  %324 = vst [vmem:[#allocation3 + $0x8] sm:$0xff] %v174
  %325 = vst [vmem:[#allocation3 + $0x10] sm:$0xff] %v285
  %326 = vst [vmem:[#allocation3 + $0x18] sm:$0xff] %v178
  %327 = vst [vmem:[#allocation3 + $0x20] sm:$0xff] %v180
  %328 = vst [vmem:[#allocation3 + $0x28] sm:$0xff] %v290
  %329 = vst [vmem:[#allocation3 + $0x30] sm:$0xff] %v184
  %330 = vst [vmem:[#allocation3 + $0x38] sm:$0xff] %v186
  %331 = vst [vmem:[#allocation3 + $0x40] sm:$0xff] %v295
  %332 = vst [vmem:[#allocation3 + $0x48] sm:$0xff] %v190
  %333 = vst [vmem:[#allocation3 + $0x50] sm:$0xff] %v192
  %334 = vst [vmem:[#allocation3 + $0x58] sm:$0xff] %v300
  %335 = vst [vmem:[#allocation3 + $0x60] sm:$0xff] %v196
  %336 = vst [vmem:[#allocation3 + $0x68] sm:$0xff] %v198
  %337 = vst [vmem:[#allocation3 + $0x70] sm:$0xff] %v305
  %338 = vst [vmem:[#allocation3 + $0x78] sm:$0xff] %v202
  %339 = vst [vmem:[#allocation3 + $0x80] sm:$0xff] %v204
  %340 = vst [vmem:[#allocation3 + $0x88] sm:$0xff] %v310
  %341 = vst [vmem:[#allocation3 + $0x90] sm:$0xff] %v208
  %342 = vst [vmem:[#allocation3 + $0x98] sm:$0xff] %v210
  %343 = vst [vmem:[#allocation3 + $0xa0] sm:$0xff] %v315
  %344 = vst [vmem:[#allocation3 + $0xa8] sm:$0xff] %v214
  %345 = vst [vmem:[#allocation3 + $0xb0] sm:$0xff] %v216
  %346 = vst [vmem:[#allocation3 + $0xb8] sm:$0xff] %v320
  %v347 = vld [vmem:[#allocation2] sm:$0xff]
  %s348 = smul.u32 0, 3
  %s349 = smul.addr %s348, 8
  %s350 = scalar_lea.vmem [#allocation3], %s349
  %v351 = vld [vmem:[%s350] sm:$0xff]
  %v352 = vld [vmem:[%s350 + $0x8] sm:$0xff]
  %v353 = vld [vmem:[%s350 + $0x10] sm:$0xff]
  %v354 = vld [vmem:[%s2] sm:$0xff]
  %v355 = vld [vmem:[%s2 + $0x8] sm:$0xff]
  %v356 = vld [vmem:[%s2 + $0x10] sm:$0xff]
  %v357 = vld [vmem:[%s2 + $0x18] sm:$0xff]
  %v358 = vld [vmem:[%s2 + $0x20] sm:$0xff]
  %v359 = vld [vmem:[%s2 + $0x28] sm:$0xff]
  %v360 = vld [vmem:[%s2 + $0x30] sm:$0xff]
  %v361 = vld [vmem:[%s2 + $0x38] sm:$0xff]
  %v362 = vld [vmem:[%s2 + $0x40] sm:$0xff]
  %v363 = vld [vmem:[%s2 + $0x48] sm:$0xff]
  %v364 = vld [vmem:[%s2 + $0x50] sm:$0xff]
  %v365 = vld [vmem:[%s2 + $0x58] sm:$0xff]
  %v366 = vld [vmem:[%s2 + $0x60] sm:$0xff]
  %v367 = vld [vmem:[%s2 + $0x68] sm:$0xff]
  %v368 = vld [vmem:[%s2 + $0x70] sm:$0xff]
  %v369 = vld [vmem:[%s2 + $0x78] sm:$0xff]
  %v370 = vld [vmem:[%s2 + $0x80] sm:$0xff]
  %v371 = vld [vmem:[%s2 + $0x88] sm:$0xff]
  %v372 = vld [vmem:[%s2 + $0x90] sm:$0xff]
  %v373 = vld [vmem:[%s2 + $0x98] sm:$0xff]
  %v374 = vld [vmem:[%s2 + $0xa0] sm:$0xff]
  %v375 = vld [vmem:[%s2 + $0xa8] sm:$0xff]
  %v376 = vld [vmem:[%s2 + $0xb0] sm:$0xff]
  %v377 = vld [vmem:[%s2 + $0xb8] sm:$0xff]
  %v378 = vld [vmem:[%s2 + $0xc0] sm:$0xff]
  %v379 = vld [vmem:[%s2 + $0xc8] sm:$0xff]
  %v380 = vld [vmem:[%s2 + $0xd0] sm:$0xff]
  %v381 = vld [vmem:[%s2 + $0xd8] sm:$0xff]
  %v382 = vld [vmem:[%s2 + $0xe0] sm:$0xff]
  %v383 = vld [vmem:[%s2 + $0xe8] sm:$0xff]
  %v384 = vld [vmem:[%s2 + $0xf0] sm:$0xff]
  %v385 = vld [vmem:[%s2 + $0xf8] sm:$0xff]
  %v386 = vld [vmem:[%s2 + $0x100] sm:$0xff]
  %v387 = vld [vmem:[%s2 + $0x108] sm:$0xff]
  %v388 = vld [vmem:[%s2 + $0x110] sm:$0xff]
  %v389 = vld [vmem:[%s2 + $0x118] sm:$0xff]
  %v390 = vld [vmem:[%s2 + $0x120] sm:$0xff]
  %v391 = vld [vmem:[%s2 + $0x128] sm:$0xff]
  %v392 = vld [vmem:[%s2 + $0x130] sm:$0xff]
  %v393 = vld [vmem:[%s2 + $0x138] sm:$0xff]
  %v394 = vld [vmem:[%s2 + $0x140] sm:$0xff]
  %v395 = vld [vmem:[%s2 + $0x148] sm:$0xff]
  %v396 = vld [vmem:[%s2 + $0x150] sm:$0xff]
  %v397 = vld [vmem:[%s2 + $0x158] sm:$0xff]
  %v398 = vld [vmem:[%s2 + $0x160] sm:$0xff]
  %v399 = vld [vmem:[%s2 + $0x168] sm:$0xff]
  %v400 = vld [vmem:[%s2 + $0x170] sm:$0xff]
  %v401 = vld [vmem:[%s2 + $0x178] sm:$0xff]
  %v402 = vld [vmem:[%s4] sm:$0x7]
  %v404 = vlaneseq
  %v405 = vshrl.u32 %v404, 7
  %v406 = vsub.s32 0, %v405
  %v407 = vrot.slane %v402, %v406
  %v408 = vlaneseq
  %v409 = vshrl.u32 %v408, 7
  %v410 = vsub.s32 1, %v409
  %v411 = vrot.slane %v402, %v410
  %v412 = vlaneseq
  %v413 = vshrl.u32 %v412, 7
  %v414 = vsub.s32 2, %v413
  %v415 = vrot.slane %v402, %v414
  %419 = vmatprep.subr.mxu0 %v355
  %420 = vmatpush1.msra.mxu0 %v354
  %421 = vmatprep.subr.mxu0 %v358
  %422 = vmatpush1.msra.mxu0 %v357
  %423 = vmatprep.subr.mxu0 %v361
  %424 = vmatpush1.msra.mxu0 %v360
  %425 = vmatprep.subr.mxu0 %v364
  %426 = vmatpush1.msra.mxu0 %v363
  %427 = vmatprep.subr.mxu0 %v367
  %428 = vmatpush1.msra.mxu0 %v366
  %429 = vmatprep.subr.mxu0 %v370
  %430 = vmatpush1.msra.mxu0 %v369
  %431 = vmatprep.subr.mxu0 %v373
  %432 = vmatpush1.msra.mxu0 %v372
  %433 = vmatprep.subr.mxu0 %v376
  %434 = vmatpush1.msra.mxu0 %v375
  %435 = vmatprep.subr.mxu0 %v379
  %436 = vmatpush1.msra.mxu0 %v378
  %437 = vmatprep.subr.mxu0 %v382
  %438 = vmatpush1.msra.mxu0 %v381
  %439 = vmatprep.subr.mxu0 %v385
  %440 = vmatpush1.msra.mxu0 %v384
  %441 = vmatprep.subr.mxu0 %v388
  %442 = vmatpush1.msra.mxu0 %v387
  %443 = vmatprep.subr.mxu0 %v391
  %444 = vmatpush1.msra.mxu0 %v390
  %445 = vmatprep.subr.mxu0 %v394
  %446 = vmatpush1.msra.mxu0 %v393
  %447 = vmatprep.subr.mxu0 %v397
  %448 = vmatpush1.msra.mxu0 %v396
  %449 = vmatprep.subr.mxu0 %v400
  %450 = vmatpush1.msra.mxu0 %v399
  %451 = vmatprep.subr.mxu0 0.0
  %452 = vmatpush1.msra.mxu0 0.0
  %453 = vmatprep.subr.mxu0 0.0
  %454 = vmatpush1.msra.mxu0 0.0
  %455 = vmatprep.subr.mxu0 0.0
  %456 = vmatpush1.msra.mxu0 0.0
  %457 = vmatprep.subr.mxu0 0.0
  %458 = vmatpush1.msra.mxu0 0.0
  %459 = vmatprep.subr.mxu0 0.0
  %460 = vmatpush1.msra.mxu0 0.0
  %461 = vmatprep.subr.mxu0 0.0
  %462 = vmatpush1.msra.mxu0 0.0
  %463 = vmatprep.subr.mxu0 0.0
  %464 = vmatpush1.msra.mxu0 0.0
  %465 = vmatprep.subr.mxu0 0.0
  %466 = vmatpush1.msra.mxu0 0.0
  %467 = vmatprep.subr.mxu0 0.0
  %468 = vmatpush1.msra.mxu0 0.0
  %469 = vmatprep.subr.mxu0 0.0
  %470 = vmatpush1.msra.mxu0 0.0
  %471 = vmatprep.subr.mxu0 0.0
  %472 = vmatpush1.msra.mxu0 0.0
  %473 = vmatprep.subr.mxu0 0.0
  %474 = vmatpush1.msra.mxu0 0.0
  %475 = vmatprep.subr.mxu0 0.0
  %476 = vmatpush1.msra.mxu0 0.0
  %477 = vmatprep.subr.mxu0 0.0
  %478 = vmatpush1.msra.mxu0 0.0
  %479 = vmatprep.subr.mxu0 0.0
  %480 = vmatpush1.msra.mxu0 0.0
  %481 = vmatprep.subr.mxu0 0.0
  %482 = vmatpush1.msra.mxu0 0.0
  %483 = vmatprep.mubr.f32.mxu0 0.0
  %484 = vmatmul.mubr.f32.gmra.mrb[0].mxu0 %v347
  %v485 = vpop.f32.mrb[0].mxu0
  %v486 = vadd.f32 %v407, %v485
  %v487 = vpop.f32.mrb[0].mxu0
  %v488 = vadd.f32 %v411, %v487
  %489 = vdwg.mxu0
  %490 = vmatprep.subr.mxu0 0.0
  %491 = vmatpush1.msra.mxu0 %v356
  %492 = vmatprep.subr.mxu0 0.0
  %493 = vmatpush1.msra.mxu0 %v359
  %494 = vmatprep.subr.mxu0 0.0
  %495 = vmatpush1.msra.mxu0 %v362
  %496 = vmatprep.subr.mxu0 0.0
  %497 = vmatpush1.msra.mxu0 %v365
  %498 = vmatprep.subr.mxu0 0.0
  %499 = vmatpush1.msra.mxu0 %v368
  %500 = vmatprep.subr.mxu0 0.0
  %501 = vmatpush1.msra.mxu0 %v371
  %502 = vmatprep.subr.mxu0 0.0
  %503 = vmatpush1.msra.mxu0 %v374
  %504 = vmatprep.subr.mxu0 0.0
  %505 = vmatpush1.msra.mxu0 %v377
  %506 = vmatprep.subr.mxu0 0.0
  %507 = vmatpush1.msra.mxu0 %v380
  %508 = vmatprep.subr.mxu0 0.0
  %509 = vmatpush1.msra.mxu0 %v383
  %510 = vmatprep.subr.mxu0 0.0
  %511 = vmatpush1.msra.mxu0 %v386
  %512 = vmatprep.subr.mxu0 0.0
  %513 = vmatpush1.msra.mxu0 %v389
  %514 = vmatprep.subr.mxu0 0.0
  %515 = vmatpush1.msra.mxu0 %v392
  %516 = vmatprep.subr.mxu0 0.0
  %517 = vmatpush1.msra.mxu0 %v395
  %518 = vmatprep.subr.mxu0 0.0
  %519 = vmatpush1.msra.mxu0 %v398
  %520 = vmatprep.subr.mxu0 0.0
  %521 = vmatpush1.msra.mxu0 %v401
  %522 = vmatprep.subr.mxu0 0.0
  %523 = vmatpush1.msra.mxu0 0.0
  %524 = vmatprep.subr.mxu0 0.0
  %525 = vmatpush1.msra.mxu0 0.0
  %526 = vmatprep.subr.mxu0 0.0
  %527 = vmatpush1.msra.mxu0 0.0
  %528 = vmatprep.subr.mxu0 0.0
  %529 = vmatpush1.msra.mxu0 0.0
  %530 = vmatprep.subr.mxu0 0.0
  %531 = vmatpush1.msra.mxu0 0.0
  %532 = vmatprep.subr.mxu0 0.0
  %533 = vmatpush1.msra.mxu0 0.0
  %534 = vmatprep.subr.mxu0 0.0
  %535 = vmatpush1.msra.mxu0 0.0
  %536 = vmatprep.subr.mxu0 0.0
  %537 = vmatpush1.msra.mxu0 0.0
  %538 = vmatprep.subr.mxu0 0.0
  %539 = vmatpush1.msra.mxu0 0.0
  %540 = vmatprep.subr.mxu0 0.0
  %541 = vmatpush1.msra.mxu0 0.0
  %542 = vmatprep.subr.mxu0 0.0
  %543 = vmatpush1.msra.mxu0 0.0
  %544 = vmatprep.subr.mxu0 0.0
  %545 = vmatpush1.msra.mxu0 0.0
  %546 = vmatprep.subr.mxu0 0.0
  %547 = vmatpush1.msra.mxu0 0.0
  %548 = vmatprep.subr.mxu0 0.0
  %549 = vmatpush1.msra.mxu0 0.0
  %550 = vmatprep.subr.mxu0 0.0
  %551 = vmatpush1.msra.mxu0 0.0
  %552 = vmatprep.subr.mxu0 0.0
  %553 = vmatpush1.msra.mxu0 0.0
  %554 = vmatprep.mubr.f32.mxu0 0.0
  %555 = vmatmul.mubr.f32.gmra.mrb[0].mxu0 %v347
  %v556 = vpop.f32.mrb[0].mxu0
  %v557 = vadd.f32 %v415, %v556
  %v558 = vpop.f32.mrb[0].mxu0
  %559 = vdwg.mxu0
  %v560 = vadd.f32 %v351, %v486
  %v561 = vxor.u32 %v560, 2147483648
  %v562 = vmul.f32 %v561, 1.442695
  %v563 = vpow.pop %v562
  %v564 = vadd.f32 %v563, 1.0
  %v565 = vrcp.pop %v564
  %v566 = vmul.f32 1.0, %v565
  %v567 = vadd.f32 %v352, %v488
  %v568 = vxor.u32 %v567, 2147483648
  %v569 = vmul.f32 %v568, 1.442695
  %v570 = vpow.pop %v569
  %v571 = vadd.f32 %v570, 1.0
  %v572 = vrcp.pop %v571
  %v573 = vmul.f32 1.0, %v572
  %v574 = vmul.f32 %v566, %v557
  %v575 = vadd.f32 %v353, %v574
  %v576 = vtanh.pop %v575
  %v577 = vsub.f32 1.0, %v573
  %v578 = vmul.f32 %v577, %v576
  %v579 = vmul.f32 %v573, %v347
  %v580 = vadd.f32 %v578, %v579
  %s581 = smul.u32 1, 3
  %s582 = smul.addr %s581, 8
  %s583 = scalar_lea.vmem [#allocation3], %s582
  %v584 = vld [vmem:[%s583] sm:$0xff]
  %v585 = vld [vmem:[%s583 + $0x8] sm:$0xff]
  %v586 = vld [vmem:[%s583 + $0x10] sm:$0xff]
  %587 = vmatprep.subr.mxu0 %v355
  %588 = vmatpush1.msra.mxu0 %v354
  %589 = vmatprep.subr.mxu0 %v358
  %590 = vmatpush1.msra.mxu0 %v357
  %591 = vmatprep.subr.mxu0 %v361
  %592 = vmatpush1.msra.mxu0 %v360
  %593 = vmatprep.subr.mxu0 %v364
  %594 = vmatpush1.msra.mxu0 %v363
  %595 = vmatprep.subr.mxu0 %v367
  %596 = vmatpush1.msra.mxu0 %v366
  %597 = vmatprep.subr.mxu0 %v370
  %598 = vmatpush1.msra.mxu0 %v369
  %599 = vmatprep.subr.mxu0 %v373
  %600 = vmatpush1.msra.mxu0 %v372
  %601 = vmatprep.subr.mxu0 %v376
  %602 = vmatpush1.msra.mxu0 %v375
  %603 = vmatprep.subr.mxu0 %v379
  %604 = vmatpush1.msra.mxu0 %v378
  %605 = vmatprep.subr.mxu0 %v382
  %606 = vmatpush1.msra.mxu0 %v381
  %607 = vmatprep.subr.mxu0 %v385
  %608 = vmatpush1.msra.mxu0 %v384
  %609 = vmatprep.subr.mxu0 %v388
  %610 = vmatpush1.msra.mxu0 %v387
  %611 = vmatprep.subr.mxu0 %v391
  %612 = vmatpush1.msra.mxu0 %v390
  %613 = vmatprep.subr.mxu0 %v394
  %614 = vmatpush1.msra.mxu0 %v393
  %615 = vmatprep.subr.mxu0 %v397
  %616 = vmatpush1.msra.mxu0 %v396
  %617 = vmatprep.subr.mxu0 %v400
  %618 = vmatpush1.msra.mxu0 %v399
  %619 = vmatprep.subr.mxu0 0.0
  %620 = vmatpush1.msra.mxu0 0.0
  %621 = vmatprep.subr.mxu0 0.0
  %622 = vmatpush1.msra.mxu0 0.0
  %623 = vmatprep.subr.mxu0 0.0
  %624 = vmatpush1.msra.mxu0 0.0
  %625 = vmatprep.subr.mxu0 0.0
  %626 = vmatpush1.msra.mxu0 0.0
  %627 = vmatprep.subr.mxu0 0.0
  %628 = vmatpush1.msra.mxu0 0.0
  %629 = vmatprep.subr.mxu0 0.0
  %630 = vmatpush1.msra.mxu0 0.0
  %631 = vmatprep.subr.mxu0 0.0
  %632 = vmatpush1.msra.mxu0 0.0
  %633 = vmatprep.subr.mxu0 0.0
  %634 = vmatpush1.msra.mxu0 0.0
  %635 = vmatprep.subr.mxu0 0.0
  %636 = vmatpush1.msra.mxu0 0.0
  %637 = vmatprep.subr.mxu0 0.0
  %638 = vmatpush1.msra.mxu0 0.0
  %639 = vmatprep.subr.mxu0 0.0
  %640 = vmatpush1.msra.mxu0 0.0
  %641 = vmatprep.subr.mxu0 0.0
  %642 = vmatpush1.msra.mxu0 0.0
  %643 = vmatprep.subr.mxu0 0.0
  %644 = vmatpush1.msra.mxu0 0.0
  %645 = vmatprep.subr.mxu0 0.0
  %646 = vmatpush1.msra.mxu0 0.0
  %647 = vmatprep.subr.mxu0 0.0
  %648 = vmatpush1.msra.mxu0 0.0
  %649 = vmatprep.subr.mxu0 0.0
  %650 = vmatpush1.msra.mxu0 0.0
  %651 = vmatprep.mubr.f32.mxu0 0.0
  %652 = vmatmul.mubr.f32.gmra.mrb[0].mxu0 %v580
  %v653 = vpop.f32.mrb[0].mxu0
  %v654 = vadd.f32 %v407, %v653
  %v655 = vpop.f32.mrb[0].mxu0
  %v656 = vadd.f32 %v411, %v655
  %657 = vdwg.mxu0
  %658 = vmatprep.subr.mxu0 0.0
  %659 = vmatpush1.msra.mxu0 %v356
  %660 = vmatprep.subr.mxu0 0.0
  %661 = vmatpush1.msra.mxu0 %v359
  %662 = vmatprep.subr.mxu0 0.0
  %663 = vmatpush1.msra.mxu0 %v362
  %664 = vmatprep.subr.mxu0 0.0
  %665 = vmatpush1.msra.mxu0 %v365
  %666 = vmatprep.subr.mxu0 0.0
  %667 = vmatpush1.msra.mxu0 %v368
  %668 = vmatprep.subr.mxu0 0.0
  %669 = vmatpush1.msra.mxu0 %v371
  %670 = vmatprep.subr.mxu0 0.0
  %671 = vmatpush1.msra.mxu0 %v374
  %672 = vmatprep.subr.mxu0 0.0
  %673 = vmatpush1.msra.mxu0 %v377
  %674 = vmatprep.subr.mxu0 0.0
  %675 = vmatpush1.msra.mxu0 %v380
  %676 = vmatprep.subr.mxu0 0.0
  %677 = vmatpush1.msra.mxu0 %v383
  %678 = vmatprep.subr.mxu0 0.0
  %679 = vmatpush1.msra.mxu0 %v386
  %680 = vmatprep.subr.mxu0 0.0
  %681 = vmatpush1.msra.mxu0 %v389
  %682 = vmatprep.subr.mxu0 0.0
  %683 = vmatpush1.msra.mxu0 %v392
  %684 = vmatprep.subr.mxu0 0.0
  %685 = vmatpush1.msra.mxu0 %v395
  %686 = vmatprep.subr.mxu0 0.0
  %687 = vmatpush1.msra.mxu0 %v398
  %688 = vmatprep.subr.mxu0 0.0
  %689 = vmatpush1.msra.mxu0 %v401
  %690 = vmatprep.subr.mxu0 0.0
  %691 = vmatpush1.msra.mxu0 0.0
  %692 = vmatprep.subr.mxu0 0.0
  %693 = vmatpush1.msra.mxu0 0.0
  %694 = vmatprep.subr.mxu0 0.0
  %695 = vmatpush1.msra.mxu0 0.0
  %696 = vmatprep.subr.mxu0 0.0
  %697 = vmatpush1.msra.mxu0 0.0
  %698 = vmatprep.subr.mxu0 0.0
  %699 = vmatpush1.msra.mxu0 0.0
  %700 = vmatprep.subr.mxu0 0.0
  %701 = vmatpush1.msra.mxu0 0.0
  %702 = vmatprep.subr.mxu0 0.0
  %703 = vmatpush1.msra.mxu0 0.0
  %704 = vmatprep.subr.mxu0 0.0
  %705 = vmatpush1.msra.mxu0 0.0
  %706 = vmatprep.subr.mxu0 0.0
  %707 = vmatpush1.msra.mxu0 0.0
  %708 = vmatprep.subr.mxu0 0.0
  %709 = vmatpush1.msra.mxu0 0.0
  %710 = vmatprep.subr.mxu0 0.0
  %711 = vmatpush1.msra.mxu0 0.0
  %712 = vmatprep.subr.mxu0 0.0
  %713 = vmatpush1.msra.mxu0 0.0
  %714 = vmatprep.subr.mxu0 0.0
  %715 = vmatpush1.msra.mxu0 0.0
  %716 = vmatprep.subr.mxu0 0.0
  %717 = vmatpush1.msra.mxu0 0.0
  %718 = vmatprep.subr.mxu0 0.0
  %719 = vmatpush1.msra.mxu0 0.0
  %720 = vmatprep.subr.mxu0 0.0
  %721 = vmatpush1.msra.mxu0 0.0
  %722 = vmatprep.mubr.f32.mxu0 0.0
  %723 = vmatmul.mubr.f32.gmra.mrb[0].mxu0 %v580
  %v724 = vpop.f32.mrb[0].mxu0
  %v725 = vadd.f32 %v415, %v724
  %v726 = vpop.f32.mrb[0].mxu0
  %727 = vdwg.mxu0
  %v728 = vadd.f32 %v584, %v654
  %v729 = vxor.u32 %v728, 2147483648
  %v730 = vmul.f32 %v729, 1.442695
  %v731 = vpow.pop %v730
  %v732 = vadd.f32 %v731, 1.0
  %v733 = vrcp.pop %v732
  %v734 = vmul.f32 1.0, %v733
  %v735 = vadd.f32 %v585, %v656
  %v736 = vxor.u32 %v735, 2147483648
  %v737 = vmul.f32 %v736, 1.442695
  %v738 = vpow.pop %v737
  %v739 = vadd.f32 %v738, 1.0
  %v740 = vrcp.pop %v739
  %v741 = vmul.f32 1.0, %v740
  %v742 = vmul.f32 %v734, %v725
  %v743 = vadd.f32 %v586, %v742
  %v744 = vtanh.pop %v743
  %v745 = vsub.f32 1.0, %v741
  %v746 = vmul.f32 %v745, %v744
  %v747 = vmul.f32 %v741, %v580
  %v748 = vadd.f32 %v746, %v747
  %s749 = smul.u32 2, 3
  %s750 = smul.addr %s749, 8
  %s751 = scalar_lea.vmem [#allocation3], %s750
  %v752 = vld [vmem:[%s751] sm:$0xff]
  %v753 = vld [vmem:[%s751 + $0x8] sm:$0xff]
  %v754 = vld [vmem:[%s751 + $0x10] sm:$0xff]
  %755 = vmatprep.subr.mxu0 %v355
  %756 = vmatpush1.msra.mxu0 %v354
  %757 = vmatprep.subr.mxu0 %v358
  %758 = vmatpush1.msra.mxu0 %v357
  %759 = vmatprep.subr.mxu0 %v361
  %760 = vmatpush1.msra.mxu0 %v360
  %761 = vmatprep.subr.mxu0 %v364
  %762 = vmatpush1.msra.mxu0 %v363
  %763 = vmatprep.subr.mxu0 %v367
  %764 = vmatpush1.msra.mxu0 %v366
  %765 = vmatprep.subr.mxu0 %v370
  %766 = vmatpush1.msra.mxu0 %v369
  %767 = vmatprep.subr.mxu0 %v373
  %768 = vmatpush1.msra.mxu0 %v372
  %769 = vmatprep.subr.mxu0 %v376
  %770 = vmatpush1.msra.mxu0 %v375
  %771 = vmatprep.subr.mxu0 %v379
  %772 = vmatpush1.msra.mxu0 %v378
  %773 = vmatprep.subr.mxu0 %v382
  %774 = vmatpush1.msra.mxu0 %v381
  %775 = vmatprep.subr.mxu0 %v385
  %776 = vmatpush1.msra.mxu0 %v384
  %777 = vmatprep.subr.mxu0 %v388
  %778 = vmatpush1.msra.mxu0 %v387
  %779 = vmatprep.subr.mxu0 %v391
  %780 = vmatpush1.msra.mxu0 %v390
  %781 = vmatprep.subr.mxu0 %v394
  %782 = vmatpush1.msra.mxu0 %v393
  %783 = vmatprep.subr.mxu0 %v397
  %784 = vmatpush1.msra.mxu0 %v396
  %785 = vmatprep.subr.mxu0 %v400
  %786 = vmatpush1.msra.mxu0 %v399
  %787 = vmatprep.subr.mxu0 0.0
  %788 = vmatpush1.msra.mxu0 0.0
  %789 = vmatprep.subr.mxu0 0.0
  %790 = vmatpush1.msra.mxu0 0.0
  %791 = vmatprep.subr.mxu0 0.0
  %792 = vmatpush1.msra.mxu0 0.0
  %793 = vmatprep.subr.mxu0 0.0
  %794 = vmatpush1.msra.mxu0 0.0
  %795 = vmatprep.subr.mxu0 0.0
  %796 = vmatpush1.msra.mxu0 0.0
  %797 = vmatprep.subr.mxu0 0.0
  %798 = vmatpush1.msra.mxu0 0.0
  %799 = vmatprep.subr.mxu0 0.0
  %800 = vmatpush1.msra.mxu0 0.0
  %801 = vmatprep.subr.mxu0 0.0
  %802 = vmatpush1.msra.mxu0 0.0
  %803 = vmatprep.subr.mxu0 0.0
  %804 = vmatpush1.msra.mxu0 0.0
  %805 = vmatprep.subr.mxu0 0.0
  %806 = vmatpush1.msra.mxu0 0.0
  %807 = vmatprep.subr.mxu0 0.0
  %808 = vmatpush1.msra.mxu0 0.0
  %809 = vmatprep.subr.mxu0 0.0
  %810 = vmatpush1.msra.mxu0 0.0
  %811 = vmatprep.subr.mxu0 0.0
  %812 = vmatpush1.msra.mxu0 0.0
  %813 = vmatprep.subr.mxu0 0.0
  %814 = vmatpush1.msra.mxu0 0.0
  %815 = vmatprep.subr.mxu0 0.0
  %816 = vmatpush1.msra.mxu0 0.0
  %817 = vmatprep.subr.mxu0 0.0
  %818 = vmatpush1.msra.mxu0 0.0
  %819 = vmatprep.mubr.f32.mxu0 0.0
  %820 = vmatmul.mubr.f32.gmra.mrb[0].mxu0 %v748
  %v821 = vpop.f32.mrb[0].mxu0
  %v822 = vadd.f32 %v407, %v821
  %v823 = vpop.f32.mrb[0].mxu0
  %v824 = vadd.f32 %v411, %v823
  %825 = vdwg.mxu0
  %826 = vmatprep.subr.mxu0 0.0
  %827 = vmatpush1.msra.mxu0 %v356
  %828 = vmatprep.subr.mxu0 0.0
  %829 = vmatpush1.msra.mxu0 %v359
  %830 = vmatprep.subr.mxu0 0.0
  %831 = vmatpush1.msra.mxu0 %v362
  %832 = vmatprep.subr.mxu0 0.0
  %833 = vmatpush1.msra.mxu0 %v365
  %834 = vmatprep.subr.mxu0 0.0
  %835 = vmatpush1.msra.mxu0 %v368
  %836 = vmatprep.subr.mxu0 0.0
  %837 = vmatpush1.msra.mxu0 %v371
  %838 = vmatprep.subr.mxu0 0.0
  %839 = vmatpush1.msra.mxu0 %v374
  %840 = vmatprep.subr.mxu0 0.0
  %841 = vmatpush1.msra.mxu0 %v377
  %842 = vmatprep.subr.mxu0 0.0
  %843 = vmatpush1.msra.mxu0 %v380
  %844 = vmatprep.subr.mxu0 0.0
  %845 = vmatpush1.msra.mxu0 %v383
  %846 = vmatprep.subr.mxu0 0.0
  %847 = vmatpush1.msra.mxu0 %v386
  %848 = vmatprep.subr.mxu0 0.0
  %849 = vmatpush1.msra.mxu0 %v389
  %850 = vmatprep.subr.mxu0 0.0
  %851 = vmatpush1.msra.mxu0 %v392
  %852 = vmatprep.subr.mxu0 0.0
  %853 = vmatpush1.msra.mxu0 %v395
  %854 = vmatprep.subr.mxu0 0.0
  %855 = vmatpush1.msra.mxu0 %v398
  %856 = vmatprep.subr.mxu0 0.0
  %857 = vmatpush1.msra.mxu0 %v401
  %858 = vmatprep.subr.mxu0 0.0
  %859 = vmatpush1.msra.mxu0 0.0
  %860 = vmatprep.subr.mxu0 0.0
  %861 = vmatpush1.msra.mxu0 0.0
  %862 = vmatprep.subr.mxu0 0.0
  %863 = vmatpush1.msra.mxu0 0.0
  %864 = vmatprep.subr.mxu0 0.0
  %865 = vmatpush1.msra.mxu0 0.0
  %866 = vmatprep.subr.mxu0 0.0
  %867 = vmatpush1.msra.mxu0 0.0
  %868 = vmatprep.subr.mxu0 0.0
  %869 = vmatpush1.msra.mxu0 0.0
  %870 = vmatprep.subr.mxu0 0.0
  %871 = vmatpush1.msra.mxu0 0.0
  %872 = vmatprep.subr.mxu0 0.0
  %873 = vmatpush1.msra.mxu0 0.0
  %874 = vmatprep.subr.mxu0 0.0
  %875 = vmatpush1.msra.mxu0 0.0
  %876 = vmatprep.subr.mxu0 0.0
  %877 = vmatpush1.msra.mxu0 0.0
  %878 = vmatprep.subr.mxu0 0.0
  %879 = vmatpush1.msra.mxu0 0.0
  %880 = vmatprep.subr.mxu0 0.0
  %881 = vmatpush1.msra.mxu0 0.0
  %882 = vmatprep.subr.mxu0 0.0
  %883 = vmatpush1.msra.mxu0 0.0
  %884 = vmatprep.subr.mxu0 0.0
  %885 = vmatpush1.msra.mxu0 0.0
  %886 = vmatprep.subr.mxu0 0.0
  %887 = vmatpush1.msra.mxu0 0.0
  %888 = vmatprep.subr.mxu0 0.0
  %889 = vmatpush1.msra.mxu0 0.0
  %890 = vmatprep.mubr.f32.mxu0 0.0
  %891 = vmatmul.mubr.f32.gmra.mrb[0].mxu0 %v748
  %v892 = vpop.f32.mrb[0].mxu0
  %v893 = vadd.f32 %v415, %v892
  %v894 = vpop.f32.mrb[0].mxu0
  %895 = vdwg.mxu0
  %v896 = vadd.f32 %v752, %v822
  %v897 = vxor.u32 %v896, 2147483648
  %v898 = vmul.f32 %v897, 1.442695
  %v899 = vpow.pop %v898
  %v900 = vadd.f32 %v899, 1.0
  %v901 = vrcp.pop %v900
  %v902 = vmul.f32 1.0, %v901
  %v903 = vadd.f32 %v753, %v824
  %v904 = vxor.u32 %v903, 2147483648
  %v905 = vmul.f32 %v904, 1.442695
  %v906 = vpow.pop %v905
  %v907 = vadd.f32 %v906, 1.0
  %v908 = vrcp.pop %v907
  %v909 = vmul.f32 1.0, %v908
  %v910 = vmul.f32 %v902, %v893
  %v911 = vadd.f32 %v754, %v910
  %v912 = vtanh.pop %v911
  %v913 = vsub.f32 1.0, %v909
  %v914 = vmul.f32 %v913, %v912
  %v915 = vmul.f32 %v909, %v748
  %v916 = vadd.f32 %v914, %v915
  %s917 = smul.u32 3, 3
  %s918 = smul.addr %s917, 8
  %s919 = scalar_lea.vmem [#allocation3], %s918
  %v920 = vld [vmem:[%s919] sm:$0xff]
  %v921 = vld [vmem:[%s919 + $0x8] sm:$0xff]
  %v922 = vld [vmem:[%s919 + $0x10] sm:$0xff]
  %923 = vmatprep.subr.mxu0 %v355
  %924 = vmatpush1.msra.mxu0 %v354
  %925 = vmatprep.subr.mxu0 %v358
  %926 = vmatpush1.msra.mxu0 %v357
  %927 = vmatprep.subr.mxu0 %v361
  %928 = vmatpush1.msra.mxu0 %v360
  %929 = vmatprep.subr.mxu0 %v364
  %930 = vmatpush1.msra.mxu0 %v363
  %931 = vmatprep.subr.mxu0 %v367
  %932 = vmatpush1.msra.mxu0 %v366
  %933 = vmatprep.subr.mxu0 %v370
  %934 = vmatpush1.msra.mxu0 %v369
  %935 = vmatprep.subr.mxu0 %v373
  %936 = vmatpush1.msra.mxu0 %v372
  %937 = vmatprep.subr.mxu0 %v376
  %938 = vmatpush1.msra.mxu0 %v375
  %939 = vmatprep.subr.mxu0 %v379
  %940 = vmatpush1.msra.mxu0 %v378
  %941 = vmatprep.subr.mxu0 %v382
  %942 = vmatpush1.msra.mxu0 %v381
  %943 = vmatprep.subr.mxu0 %v385
  %944 = vmatpush1.msra.mxu0 %v384
  %945 = vmatprep.subr.mxu0 %v388
  %946 = vmatpush1.msra.mxu0 %v387
  %947 = vmatprep.subr.mxu0 %v391
  %948 = vmatpush1.msra.mxu0 %v390
  %949 = vmatprep.subr.mxu0 %v394
  %950 = vmatpush1.msra.mxu0 %v393
  %951 = vmatprep.subr.mxu0 %v397
  %952 = vmatpush1.msra.mxu0 %v396
  %953 = vmatprep.subr.mxu0 %v400
  %954 = vmatpush1.msra.mxu0 %v399
  %955 = vmatprep.subr.mxu0 0.0
  %956 = vmatpush1.msra.mxu0 0.0
  %957 = vmatprep.subr.mxu0 0.0
  %958 = vmatpush1.msra.mxu0 0.0
  %959 = vmatprep.subr.mxu0 0.0
  %960 = vmatpush1.msra.mxu0 0.0
  %961 = vmatprep.subr.mxu0 0.0
  %962 = vmatpush1.msra.mxu0 0.0
  %963 = vmatprep.subr.mxu0 0.0
  %964 = vmatpush1.msra.mxu0 0.0
  %965 = vmatprep.subr.mxu0 0.0
  %966 = vmatpush1.msra.mxu0 0.0
  %967 = vmatprep.subr.mxu0 0.0
  %968 = vmatpush1.msra.mxu0 0.0
  %969 = vmatprep.subr.mxu0 0.0
  %970 = vmatpush1.msra.mxu0 0.0
  %971 = vmatprep.subr.mxu0 0.0
  %972 = vmatpush1.msra.mxu0 0.0
  %973 = vmatprep.subr.mxu0 0.0
  %974 = vmatpush1.msra.mxu0 0.0
  %975 = vmatprep.subr.mxu0 0.0
  %976 = vmatpush1.msra.mxu0 0.0
  %977 = vmatprep.subr.mxu0 0.0
  %978 = vmatpush1.msra.mxu0 0.0
  %979 = vmatprep.subr.mxu0 0.0
  %980 = vmatpush1.msra.mxu0 0.0
  %981 = vmatprep.subr.mxu0 0.0
  %982 = vmatpush1.msra.mxu0 0.0
  %983 = vmatprep.subr.mxu0 0.0
  %984 = vmatpush1.msra.mxu0 0.0
  %985 = vmatprep.subr.mxu0 0.0
  %986 = vmatpush1.msra.mxu0 0.0
  %987 = vmatprep.mubr.f32.mxu0 0.0
  %988 = vmatmul.mubr.f32.gmra.mrb[0].mxu0 %v916
  %v989 = vpop.f32.mrb[0].mxu0
  %v990 = vadd.f32 %v407, %v989
  %v991 = vpop.f32.mrb[0].mxu0
  %v992 = vadd.f32 %v411, %v991
  %993 = vdwg.mxu0
  %994 = vmatprep.subr.mxu0 0.0
  %995 = vmatpush1.msra.mxu0 %v356
  %996 = vmatprep.subr.mxu0 0.0
  %997 = vmatpush1.msra.mxu0 %v359
  %998 = vmatprep.subr.mxu0 0.0
  %999 = vmatpush1.msra.mxu0 %v362
  %1000 = vmatprep.subr.mxu0 0.0
  %1001 = vmatpush1.msra.mxu0 %v365
  %1002 = vmatprep.subr.mxu0 0.0
  %1003 = vmatpush1.msra.mxu0 %v368
  %1004 = vmatprep.subr.mxu0 0.0
  %1005 = vmatpush1.msra.mxu0 %v371
  %1006 = vmatprep.subr.mxu0 0.0
  %1007 = vmatpush1.msra.mxu0 %v374
  %1008 = vmatprep.subr.mxu0 0.0
  %1009 = vmatpush1.msra.mxu0 %v377
  %1010 = vmatprep.subr.mxu0 0.0
  %1011 = vmatpush1.msra.mxu0 %v380
  %1012 = vmatprep.subr.mxu0 0.0
  %1013 = vmatpush1.msra.mxu0 %v383
  %1014 = vmatprep.subr.mxu0 0.0
  %1015 = vmatpush1.msra.mxu0 %v386
  %1016 = vmatprep.subr.mxu0 0.0
  %1017 = vmatpush1.msra.mxu0 %v389
  %1018 = vmatprep.subr.mxu0 0.0
  %1019 = vmatpush1.msra.mxu0 %v392
  %1020 = vmatprep.subr.mxu0 0.0
  %1021 = vmatpush1.msra.mxu0 %v395
  %1022 = vmatprep.subr.mxu0 0.0
  %1023 = vmatpush1.msra.mxu0 %v398
  %1024 = vmatprep.subr.mxu0 0.0
  %1025 = vmatpush1.msra.mxu0 %v401
  %1026 = vmatprep.subr.mxu0 0.0
  %1027 = vmatpush1.msra.mxu0 0.0
  %1028 = vmatprep.subr.mxu0 0.0
  %1029 = vmatpush1.msra.mxu0 0.0
  %1030 = vmatprep.subr.mxu0 0.0
  %1031 = vmatpush1.msra.mxu0 0.0
  %1032 = vmatprep.subr.mxu0 0.0
  %1033 = vmatpush1.msra.mxu0 0.0
  %1034 = vmatprep.subr.mxu0 0.0
  %1035 = vmatpush1.msra.mxu0 0.0
  %1036 = vmatprep.subr.mxu0 0.0
  %1037 = vmatpush1.msra.mxu0 0.0
  %1038 = vmatprep.subr.mxu0 0.0
  %1039 = vmatpush1.msra.mxu0 0.0
  %1040 = vmatprep.subr.mxu0 0.0
  %1041 = vmatpush1.msra.mxu0 0.0
  %1042 = vmatprep.subr.mxu0 0.0
  %1043 = vmatpush1.msra.mxu0 0.0
  %1044 = vmatprep.subr.mxu0 0.0
  %1045 = vmatpush1.msra.mxu0 0.0
  %1046 = vmatprep.subr.mxu0 0.0
  %1047 = vmatpush1.msra.mxu0 0.0
  %1048 = vmatprep.subr.mxu0 0.0
  %1049 = vmatpush1.msra.mxu0 0.0
  %1050 = vmatprep.subr.mxu0 0.0
  %1051 = vmatpush1.msra.mxu0 0.0
  %1052 = vmatprep.subr.mxu0 0.0
  %1053 = vmatpush1.msra.mxu0 0.0
  %1054 = vmatprep.subr.mxu0 0.0
  %1055 = vmatpush1.msra.mxu0 0.0
  %1056 = vmatprep.subr.mxu0 0.0
  %1057 = vmatpush1.msra.mxu0 0.0
  %1058 = vmatprep.mubr.f32.mxu0 0.0
  %1059 = vmatmul.mubr.f32.gmra.mrb[0].mxu0 %v916
  %v1060 = vpop.f32.mrb[0].mxu0
  %v1061 = vadd.f32 %v415, %v1060
  %v1062 = vpop.f32.mrb[0].mxu0
  %1063 = vdwg.mxu0
  %v1064 = vadd.f32 %v920, %v990
  %v1065 = vxor.u32 %v1064, 2147483648
  %v1066 = vmul.f32 %v1065, 1.442695
  %v1067 = vpow.pop %v1066
  %v1068 = vadd.f32 %v1067, 1.0
  %v1069 = vrcp.pop %v1068
  %v1070 = vmul.f32 1.0, %v1069
  %v1071 = vadd.f32 %v921, %v992
  %v1072 = vxor.u32 %v1071, 2147483648
  %v1073 = vmul.f32 %v1072, 1.442695
  %v1074 = vpow.pop %v1073
  %v1075 = vadd.f32 %v1074, 1.0
  %v1076 = vrcp.pop %v1075
  %v1077 = vmul.f32 1.0, %v1076
  %v1078 = vmul.f32 %v1070, %v1061
  %v1079 = vadd.f32 %v922, %v1078
  %v1080 = vtanh.pop %v1079
  %v1081 = vsub.f32 1.0, %v1077
  %v1082 = vmul.f32 %v1081, %v1080
  %v1083 = vmul.f32 %v1077, %v916
  %v1084 = vadd.f32 %v1082, %v1083
  %s1085 = smul.u32 4, 3
  %s1086 = smul.addr %s1085, 8
  %s1087 = scalar_lea.vmem [#allocation3], %s1086
  %v1088 = vld [vmem:[%s1087] sm:$0xff]
  %v1089 = vld [vmem:[%s1087 + $0x8] sm:$0xff]
  %v1090 = vld [vmem:[%s1087 + $0x10] sm:$0xff]
  %1091 = vmatprep.subr.mxu0 %v355
  %1092 = vmatpush1.msra.mxu0 %v354
  %1093 = vmatprep.subr.mxu0 %v358
  %1094 = vmatpush1.msra.mxu0 %v357
  %1095 = vmatprep.subr.mxu0 %v361
  %1096 = vmatpush1.msra.mxu0 %v360
  %1097 = vmatprep.subr.mxu0 %v364
  %1098 = vmatpush1.msra.mxu0 %v363
  %1099 = vmatprep.subr.mxu0 %v367
  %1100 = vmatpush1.msra.mxu0 %v366
  %1101 = vmatprep.subr.mxu0 %v370
  %1102 = vmatpush1.msra.mxu0 %v369
  %1103 = vmatprep.subr.mxu0 %v373
  %1104 = vmatpush1.msra.mxu0 %v372
  %1105 = vmatprep.subr.mxu0 %v376
  %1106 = vmatpush1.msra.mxu0 %v375
  %1107 = vmatprep.subr.mxu0 %v379
  %1108 = vmatpush1.msra.mxu0 %v378
  %1109 = vmatprep.subr.mxu0 %v382
  %1110 = vmatpush1.msra.mxu0 %v381
  %1111 = vmatprep.subr.mxu0 %v385
  %1112 = vmatpush1.msra.mxu0 %v384
  %1113 = vmatprep.subr.mxu0 %v388
  %1114 = vmatpush1.msra.mxu0 %v387
  %1115 = vmatprep.subr.mxu0 %v391
  %1116 = vmatpush1.msra.mxu0 %v390
  %1117 = vmatprep.subr.mxu0 %v394
  %1118 = vmatpush1.msra.mxu0 %v393
  %1119 = vmatprep.subr.mxu0 %v397
  %1120 = vmatpush1.msra.mxu0 %v396
  %1121 = vmatprep.subr.mxu0 %v400
  %1122 = vmatpush1.msra.mxu0 %v399
  %1123 = vmatprep.subr.mxu0 0.0
  %1124 = vmatpush1.msra.mxu0 0.0
  %1125 = vmatprep.subr.mxu0 0.0
  %1126 = vmatpush1.msra.mxu0 0.0
  %1127 = vmatprep.subr.mxu0 0.0
  %1128 = vmatpush1.msra.mxu0 0.0
  %1129 = vmatprep.subr.mxu0 0.0
  %1130 = vmatpush1.msra.mxu0 0.0
  %1131 = vmatprep.subr.mxu0 0.0
  %1132 = vmatpush1.msra.mxu0 0.0
  %1133 = vmatprep.subr.mxu0 0.0
  %1134 = vmatpush1.msra.mxu0 0.0
  %1135 = vmatprep.subr.mxu0 0.0
  %1136 = vmatpush1.msra.mxu0 0.0
  %1137 = vmatprep.subr.mxu0 0.0
  %1138 = vmatpush1.msra.mxu0 0.0
  %1139 = vmatprep.subr.mxu0 0.0
  %1140 = vmatpush1.msra.mxu0 0.0
  %1141 = vmatprep.subr.mxu0 0.0
  %1142 = vmatpush1.msra.mxu0 0.0
  %1143 = vmatprep.subr.mxu0 0.0
  %1144 = vmatpush1.msra.mxu0 0.0
  %1145 = vmatprep.subr.mxu0 0.0
  %1146 = vmatpush1.msra.mxu0 0.0
  %1147 = vmatprep.subr.mxu0 0.0
  %1148 = vmatpush1.msra.mxu0 0.0
  %1149 = vmatprep.subr.mxu0 0.0
  %1150 = vmatpush1.msra.mxu0 0.0
  %1151 = vmatprep.subr.mxu0 0.0
  %1152 = vmatpush1.msra.mxu0 0.0
  %1153 = vmatprep.subr.mxu0 0.0
  %1154 = vmatpush1.msra.mxu0 0.0
  %1155 = vmatprep.mubr.f32.mxu0 0.0
  %1156 = vmatmul.mubr.f32.gmra.mrb[0].mxu0 %v1084
  %v1157 = vpop.f32.mrb[0].mxu0
  %v1158 = vadd.f32 %v407, %v1157
  %v1159 = vpop.f32.mrb[0].mxu0
  %v1160 = vadd.f32 %v411, %v1159
  %1161 = vdwg.mxu0
  %1162 = vmatprep.subr.mxu0 0.0
  %1163 = vmatpush1.msra.mxu0 %v356
  %1164 = vmatprep.subr.mxu0 0.0
  %1165 = vmatpush1.msra.mxu0 %v359
  %1166 = vmatprep.subr.mxu0 0.0
  %1167 = vmatpush1.msra.mxu0 %v362
  %1168 = vmatprep.subr.mxu0 0.0
  %1169 = vmatpush1.msra.mxu0 %v365
  %1170 = vmatprep.subr.mxu0 0.0
  %1171 = vmatpush1.msra.mxu0 %v368
  %1172 = vmatprep.subr.mxu0 0.0
  %1173 = vmatpush1.msra.mxu0 %v371
  %1174 = vmatprep.subr.mxu0 0.0
  %1175 = vmatpush1.msra.mxu0 %v374
  %1176 = vmatprep.subr.mxu0 0.0
  %1177 = vmatpush1.msra.mxu0 %v377
  %1178 = vmatprep.subr.mxu0 0.0
  %1179 = vmatpush1.msra.mxu0 %v380
  %1180 = vmatprep.subr.mxu0 0.0
  %1181 = vmatpush1.msra.mxu0 %v383
  %1182 = vmatprep.subr.mxu0 0.0
  %1183 = vmatpush1.msra.mxu0 %v386
  %1184 = vmatprep.subr.mxu0 0.0
  %1185 = vmatpush1.msra.mxu0 %v389
  %1186 = vmatprep.subr.mxu0 0.0
  %1187 = vmatpush1.msra.mxu0 %v392
  %1188 = vmatprep.subr.mxu0 0.0
  %1189 = vmatpush1.msra.mxu0 %v395
  %1190 = vmatprep.subr.mxu0 0.0
  %1191 = vmatpush1.msra.mxu0 %v398
  %1192 = vmatprep.subr.mxu0 0.0
  %1193 = vmatpush1.msra.mxu0 %v401
  %1194 = vmatprep.subr.mxu0 0.0
  %1195 = vmatpush1.msra.mxu0 0.0
  %1196 = vmatprep.subr.mxu0 0.0
  %1197 = vmatpush1.msra.mxu0 0.0
  %1198 = vmatprep.subr.mxu0 0.0
  %1199 = vmatpush1.msra.mxu0 0.0
  %1200 = vmatprep.subr.mxu0 0.0
  %1201 = vmatpush1.msra.mxu0 0.0
  %1202 = vmatprep.subr.mxu0 0.0
  %1203 = vmatpush1.msra.mxu0 0.0
  %1204 = vmatprep.subr.mxu0 0.0
  %1205 = vmatpush1.msra.mxu0 0.0
  %1206 = vmatprep.subr.mxu0 0.0
  %1207 = vmatpush1.msra.mxu0 0.0
  %1208 = vmatprep.subr.mxu0 0.0
  %1209 = vmatpush1.msra.mxu0 0.0
  %1210 = vmatprep.subr.mxu0 0.0
  %1211 = vmatpush1.msra.mxu0 0.0
  %1212 = vmatprep.subr.mxu0 0.0
  %1213 = vmatpush1.msra.mxu0 0.0
  %1214 = vmatprep.subr.mxu0 0.0
  %1215 = vmatpush1.msra.mxu0 0.0
  %1216 = vmatprep.subr.mxu0 0.0
  %1217 = vmatpush1.msra.mxu0 0.0
  %1218 = vmatprep.subr.mxu0 0.0
  %1219 = vmatpush1.msra.mxu0 0.0
  %1220 = vmatprep.subr.mxu0 0.0
  %1221 = vmatpush1.msra.mxu0 0.0
  %1222 = vmatprep.subr.mxu0 0.0
  %1223 = vmatpush1.msra.mxu0 0.0
  %1224 = vmatprep.subr.mxu0 0.0
  %1225 = vmatpush1.msra.mxu0 0.0
  %1226 = vmatprep.mubr.f32.mxu0 0.0
  %1227 = vmatmul.mubr.f32.gmra.mrb[0].mxu0 %v1084
  %v1228 = vpop.f32.mrb[0].mxu0
  %v1229 = vadd.f32 %v415, %v1228
  %v1230 = vpop.f32.mrb[0].mxu0
  %1231 = vdwg.mxu0
  %v1232 = vadd.f32 %v1088, %v1158
  %v1233 = vxor.u32 %v1232, 2147483648
  %v1234 = vmul.f32 %v1233, 1.442695
  %v1235 = vpow.pop %v1234
  %v1236 = vadd.f32 %v1235, 1.0
  %v1237 = vrcp.pop %v1236
  %v1238 = vmul.f32 1.0, %v1237
  %v1239 = vadd.f32 %v1089, %v1160
  %v1240 = vxor.u32 %v1239, 2147483648
  %v1241 = vmul.f32 %v1240, 1.442695
  %v1242 = vpow.pop %v1241
  %v1243 = vadd.f32 %v1242, 1.0
  %v1244 = vrcp.pop %v1243
  %v1245 = vmul.f32 1.0, %v1244
  %v1246 = vmul.f32 %v1238, %v1229
  %v1247 = vadd.f32 %v1090, %v1246
  %v1248 = vtanh.pop %v1247
  %v1249 = vsub.f32 1.0, %v1245
  %v1250 = vmul.f32 %v1249, %v1248
  %v1251 = vmul.f32 %v1245, %v1084
  %v1252 = vadd.f32 %v1250, %v1251
  %s1253 = smul.u32 5, 3
  %s1254 = smul.addr %s1253, 8
  %s1255 = scalar_lea.vmem [#allocation3], %s1254
  %v1256 = vld [vmem:[%s1255] sm:$0xff]
  %v1257 = vld [vmem:[%s1255 + $0x8] sm:$0xff]
  %v1258 = vld [vmem:[%s1255 + $0x10] sm:$0xff]
  %1259 = vmatprep.subr.mxu0 %v355
  %1260 = vmatpush1.msra.mxu0 %v354
  %1261 = vmatprep.subr.mxu0 %v358
  %1262 = vmatpush1.msra.mxu0 %v357
  %1263 = vmatprep.subr.mxu0 %v361
  %1264 = vmatpush1.msra.mxu0 %v360
  %1265 = vmatprep.subr.mxu0 %v364
  %1266 = vmatpush1.msra.mxu0 %v363
  %1267 = vmatprep.subr.mxu0 %v367
  %1268 = vmatpush1.msra.mxu0 %v366
  %1269 = vmatprep.subr.mxu0 %v370
  %1270 = vmatpush1.msra.mxu0 %v369
  %1271 = vmatprep.subr.mxu0 %v373
  %1272 = vmatpush1.msra.mxu0 %v372
  %1273 = vmatprep.subr.mxu0 %v376
  %1274 = vmatpush1.msra.mxu0 %v375
  %1275 = vmatprep.subr.mxu0 %v379
  %1276 = vmatpush1.msra.mxu0 %v378
  %1277 = vmatprep.subr.mxu0 %v382
  %1278 = vmatpush1.msra.mxu0 %v381
  %1279 = vmatprep.subr.mxu0 %v385
  %1280 = vmatpush1.msra.mxu0 %v384
  %1281 = vmatprep.subr.mxu0 %v388
  %1282 = vmatpush1.msra.mxu0 %v387
  %1283 = vmatprep.subr.mxu0 %v391
  %1284 = vmatpush1.msra.mxu0 %v390
  %1285 = vmatprep.subr.mxu0 %v394
  %1286 = vmatpush1.msra.mxu0 %v393
  %1287 = vmatprep.subr.mxu0 %v397
  %1288 = vmatpush1.msra.mxu0 %v396
  %1289 = vmatprep.subr.mxu0 %v400
  %1290 = vmatpush1.msra.mxu0 %v399
  %1291 = vmatprep.subr.mxu0 0.0
  %1292 = vmatpush1.msra.mxu0 0.0
  %1293 = vmatprep.subr.mxu0 0.0
  %1294 = vmatpush1.msra.mxu0 0.0
  %1295 = vmatprep.subr.mxu0 0.0
  %1296 = vmatpush1.msra.mxu0 0.0
  %1297 = vmatprep.subr.mxu0 0.0
  %1298 = vmatpush1.msra.mxu0 0.0
  %1299 = vmatprep.subr.mxu0 0.0
  %1300 = vmatpush1.msra.mxu0 0.0
  %1301 = vmatprep.subr.mxu0 0.0
  %1302 = vmatpush1.msra.mxu0 0.0
  %1303 = vmatprep.subr.mxu0 0.0
  %1304 = vmatpush1.msra.mxu0 0.0
  %1305 = vmatprep.subr.mxu0 0.0
  %1306 = vmatpush1.msra.mxu0 0.0
  %1307 = vmatprep.subr.mxu0 0.0
  %1308 = vmatpush1.msra.mxu0 0.0
  %1309 = vmatprep.subr.mxu0 0.0
  %1310 = vmatpush1.msra.mxu0 0.0
  %1311 = vmatprep.subr.mxu0 0.0
  %1312 = vmatpush1.msra.mxu0 0.0
  %1313 = vmatprep.subr.mxu0 0.0
  %1314 = vmatpush1.msra.mxu0 0.0
  %1315 = vmatprep.subr.mxu0 0.0
  %1316 = vmatpush1.msra.mxu0 0.0
  %1317 = vmatprep.subr.mxu0 0.0
  %1318 = vmatpush1.msra.mxu0 0.0
  %1319 = vmatprep.subr.mxu0 0.0
  %1320 = vmatpush1.msra.mxu0 0.0
  %1321 = vmatprep.subr.mxu0 0.0
  %1322 = vmatpush1.msra.mxu0 0.0
  %1323 = vmatprep.mubr.f32.mxu0 0.0
  %1324 = vmatmul.mubr.f32.gmra.mrb[0].mxu0 %v1252
  %v1325 = vpop.f32.mrb[0].mxu0
  %v1326 = vadd.f32 %v407, %v1325
  %v1327 = vpop.f32.mrb[0].mxu0
  %v1328 = vadd.f32 %v411, %v1327
  %1329 = vdwg.mxu0
  %1330 = vmatprep.subr.mxu0 0.0
  %1331 = vmatpush1.msra.mxu0 %v356
  %1332 = vmatprep.subr.mxu0 0.0
  %1333 = vmatpush1.msra.mxu0 %v359
  %1334 = vmatprep.subr.mxu0 0.0
  %1335 = vmatpush1.msra.mxu0 %v362
  %1336 = vmatprep.subr.mxu0 0.0
  %1337 = vmatpush1.msra.mxu0 %v365
  %1338 = vmatprep.subr.mxu0 0.0
  %1339 = vmatpush1.msra.mxu0 %v368
  %1340 = vmatprep.subr.mxu0 0.0
  %1341 = vmatpush1.msra.mxu0 %v371
  %1342 = vmatprep.subr.mxu0 0.0
  %1343 = vmatpush1.msra.mxu0 %v374
  %1344 = vmatprep.subr.mxu0 0.0
  %1345 = vmatpush1.msra.mxu0 %v377
  %1346 = vmatprep.subr.mxu0 0.0
  %1347 = vmatpush1.msra.mxu0 %v380
  %1348 = vmatprep.subr.mxu0 0.0
  %1349 = vmatpush1.msra.mxu0 %v383
  %1350 = vmatprep.subr.mxu0 0.0
  %1351 = vmatpush1.msra.mxu0 %v386
  %1352 = vmatprep.subr.mxu0 0.0
  %1353 = vmatpush1.msra.mxu0 %v389
  %1354 = vmatprep.subr.mxu0 0.0
  %1355 = vmatpush1.msra.mxu0 %v392
  %1356 = vmatprep.subr.mxu0 0.0
  %1357 = vmatpush1.msra.mxu0 %v395
  %1358 = vmatprep.subr.mxu0 0.0
  %1359 = vmatpush1.msra.mxu0 %v398
  %1360 = vmatprep.subr.mxu0 0.0
  %1361 = vmatpush1.msra.mxu0 %v401
  %1362 = vmatprep.subr.mxu0 0.0
  %1363 = vmatpush1.msra.mxu0 0.0
  %1364 = vmatprep.subr.mxu0 0.0
  %1365 = vmatpush1.msra.mxu0 0.0
  %1366 = vmatprep.subr.mxu0 0.0
  %1367 = vmatpush1.msra.mxu0 0.0
  %1368 = vmatprep.subr.mxu0 0.0
  %1369 = vmatpush1.msra.mxu0 0.0
  %1370 = vmatprep.subr.mxu0 0.0
  %1371 = vmatpush1.msra.mxu0 0.0
  %1372 = vmatprep.subr.mxu0 0.0
  %1373 = vmatpush1.msra.mxu0 0.0
  %1374 = vmatprep.subr.mxu0 0.0
  %1375 = vmatpush1.msra.mxu0 0.0
  %1376 = vmatprep.subr.mxu0 0.0
  %1377 = vmatpush1.msra.mxu0 0.0
  %1378 = vmatprep.subr.mxu0 0.0
  %1379 = vmatpush1.msra.mxu0 0.0
  %1380 = vmatprep.subr.mxu0 0.0
  %1381 = vmatpush1.msra.mxu0 0.0
  %1382 = vmatprep.subr.mxu0 0.0
  %1383 = vmatpush1.msra.mxu0 0.0
  %1384 = vmatprep.subr.mxu0 0.0
  %1385 = vmatpush1.msra.mxu0 0.0
  %1386 = vmatprep.subr.mxu0 0.0
  %1387 = vmatpush1.msra.mxu0 0.0
  %1388 = vmatprep.subr.mxu0 0.0
  %1389 = vmatpush1.msra.mxu0 0.0
  %1390 = vmatprep.subr.mxu0 0.0
  %1391 = vmatpush1.msra.mxu0 0.0
  %1392 = vmatprep.subr.mxu0 0.0
  %1393 = vmatpush1.msra.mxu0 0.0
  %1394 = vmatprep.mubr.f32.mxu0 0.0
  %1395 = vmatmul.mubr.f32.gmra.mrb[0].mxu0 %v1252
  %v1396 = vpop.f32.mrb[0].mxu0
  %v1397 = vadd.f32 %v415, %v1396
  %v1398 = vpop.f32.mrb[0].mxu0
  %1399 = vdwg.mxu0
  %v1400 = vadd.f32 %v1256, %v1326
  %v1401 = vxor.u32 %v1400, 2147483648
  %v1402 = vmul.f32 %v1401, 1.442695
  %v1403 = vpow.pop %v1402
  %v1404 = vadd.f32 %v1403, 1.0
  %v1405 = vrcp.pop %v1404
  %v1406 = vmul.f32 1.0, %v1405
  %v1407 = vadd.f32 %v1257, %v1328
  %v1408 = vxor.u32 %v1407, 2147483648
  %v1409 = vmul.f32 %v1408, 1.442695
  %v1410 = vpow.pop %v1409
  %v1411 = vadd.f32 %v1410, 1.0
  %v1412 = vrcp.pop %v1411
  %v1413 = vmul.f32 1.0, %v1412
  %v1414 = vmul.f32 %v1406, %v1397
  %v1415 = vadd.f32 %v1258, %v1414
  %v1416 = vtanh.pop %v1415
  %v1417 = vsub.f32 1.0, %v1413
  %v1418 = vmul.f32 %v1417, %v1416
  %v1419 = vmul.f32 %v1413, %v1252
  %v1420 = vadd.f32 %v1418, %v1419
  %s1421 = smul.u32 6, 3
  %s1422 = smul.addr %s1421, 8
  %s1423 = scalar_lea.vmem [#allocation3], %s1422
  %v1424 = vld [vmem:[%s1423] sm:$0xff]
  %v1425 = vld [vmem:[%s1423 + $0x8] sm:$0xff]
  %v1426 = vld [vmem:[%s1423 + $0x10] sm:$0xff]
  %1427 = vmatprep.subr.mxu0 %v355
  %1428 = vmatpush1.msra.mxu0 %v354
  %1429 = vmatprep.subr.mxu0 %v358
  %1430 = vmatpush1.msra.mxu0 %v357
  %1431 = vmatprep.subr.mxu0 %v361
  %1432 = vmatpush1.msra.mxu0 %v360
  %1433 = vmatprep.subr.mxu0 %v364
  %1434 = vmatpush1.msra.mxu0 %v363
  %1435 = vmatprep.subr.mxu0 %v367
  %1436 = vmatpush1.msra.mxu0 %v366
  %1437 = vmatprep.subr.mxu0 %v370
  %1438 = vmatpush1.msra.mxu0 %v369
  %1439 = vmatprep.subr.mxu0 %v373
  %1440 = vmatpush1.msra.mxu0 %v372
  %1441 = vmatprep.subr.mxu0 %v376
  %1442 = vmatpush1.msra.mxu0 %v375
  %1443 = vmatprep.subr.mxu0 %v379
  %1444 = vmatpush1.msra.mxu0 %v378
  %1445 = vmatprep.subr.mxu0 %v382
  %1446 = vmatpush1.msra.mxu0 %v381
  %1447 = vmatprep.subr.mxu0 %v385
  %1448 = vmatpush1.msra.mxu0 %v384
  %1449 = vmatprep.subr.mxu0 %v388
  %1450 = vmatpush1.msra.mxu0 %v387
  %1451 = vmatprep.subr.mxu0 %v391
  %1452 = vmatpush1.msra.mxu0 %v390
  %1453 = vmatprep.subr.mxu0 %v394
  %1454 = vmatpush1.msra.mxu0 %v393
  %1455 = vmatprep.subr.mxu0 %v397
  %1456 = vmatpush1.msra.mxu0 %v396
  %1457 = vmatprep.subr.mxu0 %v400
  %1458 = vmatpush1.msra.mxu0 %v399
  %1459 = vmatprep.subr.mxu0 0.0
  %1460 = vmatpush1.msra.mxu0 0.0
  %1461 = vmatprep.subr.mxu0 0.0
  %1462 = vmatpush1.msra.mxu0 0.0
  %1463 = vmatprep.subr.mxu0 0.0
  %1464 = vmatpush1.msra.mxu0 0.0
  %1465 = vmatprep.subr.mxu0 0.0
  %1466 = vmatpush1.msra.mxu0 0.0
  %1467 = vmatprep.subr.mxu0 0.0
  %1468 = vmatpush1.msra.mxu0 0.0
  %1469 = vmatprep.subr.mxu0 0.0
  %1470 = vmatpush1.msra.mxu0 0.0
  %1471 = vmatprep.subr.mxu0 0.0
  %1472 = vmatpush1.msra.mxu0 0.0
  %1473 = vmatprep.subr.mxu0 0.0
  %1474 = vmatpush1.msra.mxu0 0.0
  %1475 = vmatprep.subr.mxu0 0.0
  %1476 = vmatpush1.msra.mxu0 0.0
  %1477 = vmatprep.subr.mxu0 0.0
  %1478 = vmatpush1.msra.mxu0 0.0
  %1479 = vmatprep.subr.mxu0 0.0
  %1480 = vmatpush1.msra.mxu0 0.0
  %1481 = vmatprep.subr.mxu0 0.0
  %1482 = vmatpush1.msra.mxu0 0.0
  %1483 = vmatprep.subr.mxu0 0.0
  %1484 = vmatpush1.msra.mxu0 0.0
  %1485 = vmatprep.subr.mxu0 0.0
  %1486 = vmatpush1.msra.mxu0 0.0
  %1487 = vmatprep.subr.mxu0 0.0
  %1488 = vmatpush1.msra.mxu0 0.0
  %1489 = vmatprep.subr.mxu0 0.0
  %1490 = vmatpush1.msra.mxu0 0.0
  %1491 = vmatprep.mubr.f32.mxu0 0.0
  %1492 = vmatmul.mubr.f32.gmra.mrb[0].mxu0 %v1420
  %v1493 = vpop.f32.mrb[0].mxu0
  %v1494 = vadd.f32 %v407, %v1493
  %v1495 = vpop.f32.mrb[0].mxu0
  %v1496 = vadd.f32 %v411, %v1495
  %1497 = vdwg.mxu0
  %1498 = vmatprep.subr.mxu0 0.0
  %1499 = vmatpush1.msra.mxu0 %v356
  %1500 = vmatprep.subr.mxu0 0.0
  %1501 = vmatpush1.msra.mxu0 %v359
  %1502 = vmatprep.subr.mxu0 0.0
  %1503 = vmatpush1.msra.mxu0 %v362
  %1504 = vmatprep.subr.mxu0 0.0
  %1505 = vmatpush1.msra.mxu0 %v365
  %1506 = vmatprep.subr.mxu0 0.0
  %1507 = vmatpush1.msra.mxu0 %v368
  %1508 = vmatprep.subr.mxu0 0.0
  %1509 = vmatpush1.msra.mxu0 %v371
  %1510 = vmatprep.subr.mxu0 0.0
  %1511 = vmatpush1.msra.mxu0 %v374
  %1512 = vmatprep.subr.mxu0 0.0
  %1513 = vmatpush1.msra.mxu0 %v377
  %1514 = vmatprep.subr.mxu0 0.0
  %1515 = vmatpush1.msra.mxu0 %v380
  %1516 = vmatprep.subr.mxu0 0.0
  %1517 = vmatpush1.msra.mxu0 %v383
  %1518 = vmatprep.subr.mxu0 0.0
  %1519 = vmatpush1.msra.mxu0 %v386
  %1520 = vmatprep.subr.mxu0 0.0
  %1521 = vmatpush1.msra.mxu0 %v389
  %1522 = vmatprep.subr.mxu0 0.0
  %1523 = vmatpush1.msra.mxu0 %v392
  %1524 = vmatprep.subr.mxu0 0.0
  %1525 = vmatpush1.msra.mxu0 %v395
  %1526 = vmatprep.subr.mxu0 0.0
  %1527 = vmatpush1.msra.mxu0 %v398
  %1528 = vmatprep.subr.mxu0 0.0
  %1529 = vmatpush1.msra.mxu0 %v401
  %1530 = vmatprep.subr.mxu0 0.0
  %1531 = vmatpush1.msra.mxu0 0.0
  %1532 = vmatprep.subr.mxu0 0.0
  %1533 = vmatpush1.msra.mxu0 0.0
  %1534 = vmatprep.subr.mxu0 0.0
  %1535 = vmatpush1.msra.mxu0 0.0
  %1536 = vmatprep.subr.mxu0 0.0
  %1537 = vmatpush1.msra.mxu0 0.0
  %1538 = vmatprep.subr.mxu0 0.0
  %1539 = vmatpush1.msra.mxu0 0.0
  %1540 = vmatprep.subr.mxu0 0.0
  %1541 = vmatpush1.msra.mxu0 0.0
  %1542 = vmatprep.subr.mxu0 0.0
  %1543 = vmatpush1.msra.mxu0 0.0
  %1544 = vmatprep.subr.mxu0 0.0
  %1545 = vmatpush1.msra.mxu0 0.0
  %1546 = vmatprep.subr.mxu0 0.0
  %1547 = vmatpush1.msra.mxu0 0.0
  %1548 = vmatprep.subr.mxu0 0.0
  %1549 = vmatpush1.msra.mxu0 0.0
  %1550 = vmatprep.subr.mxu0 0.0
  %1551 = vmatpush1.msra.mxu0 0.0
  %1552 = vmatprep.subr.mxu0 0.0
  %1553 = vmatpush1.msra.mxu0 0.0
  %1554 = vmatprep.subr.mxu0 0.0
  %1555 = vmatpush1.msra.mxu0 0.0
  %1556 = vmatprep.subr.mxu0 0.0
  %1557 = vmatpush1.msra.mxu0 0.0
  %1558 = vmatprep.subr.mxu0 0.0
  %1559 = vmatpush1.msra.mxu0 0.0
  %1560 = vmatprep.subr.mxu0 0.0
  %1561 = vmatpush1.msra.mxu0 0.0
  %1562 = vmatprep.mubr.f32.mxu0 0.0
  %1563 = vmatmul.mubr.f32.gmra.mrb[0].mxu0 %v1420
  %v1564 = vpop.f32.mrb[0].mxu0
  %v1565 = vadd.f32 %v415, %v1564
  %v1566 = vpop.f32.mrb[0].mxu0
  %1567 = vdwg.mxu0
  %v1568 = vadd.f32 %v1424, %v1494
  %v1569 = vxor.u32 %v1568, 2147483648
  %v1570 = vmul.f32 %v1569, 1.442695
  %v1571 = vpow.pop %v1570
  %v1572 = vadd.f32 %v1571, 1.0
  %v1573 = vrcp.pop %v1572
  %v1574 = vmul.f32 1.0, %v1573
  %v1575 = vadd.f32 %v1425, %v1496
  %v1576 = vxor.u32 %v1575, 2147483648
  %v1577 = vmul.f32 %v1576, 1.442695
  %v1578 = vpow.pop %v1577
  %v1579 = vadd.f32 %v1578, 1.0
  %v1580 = vrcp.pop %v1579
  %v1581 = vmul.f32 1.0, %v1580
  %v1582 = vmul.f32 %v1574, %v1565
  %v1583 = vadd.f32 %v1426, %v1582
  %v1584 = vtanh.pop %v1583
  %v1585 = vsub.f32 1.0, %v1581
  %v1586 = vmul.f32 %v1585, %v1584
  %v1587 = vmul.f32 %v1581, %v1420
  %v1588 = vadd.f32 %v1586, %v1587
  %s1589 = smul.u32 7, 3
  %s1590 = smul.addr %s1589, 8
  %s1591 = scalar_lea.vmem [#allocation3], %s1590
  %v1592 = vld [vmem:[%s1591] sm:$0xff]
  %v1593 = vld [vmem:[%s1591 + $0x8] sm:$0xff]
  %v1594 = vld [vmem:[%s1591 + $0x10] sm:$0xff]
  %1595 = vmatprep.subr.mxu0 %v355
  %1596 = vmatpush1.msra.mxu0 %v354
  %1597 = vmatprep.subr.mxu0 %v358
  %1598 = vmatpush1.msra.mxu0 %v357
  %1599 = vmatprep.subr.mxu0 %v361
  %1600 = vmatpush1.msra.mxu0 %v360
  %1601 = vmatprep.subr.mxu0 %v364
  %1602 = vmatpush1.msra.mxu0 %v363
  %1603 = vmatprep.subr.mxu0 %v367
  %1604 = vmatpush1.msra.mxu0 %v366
  %1605 = vmatprep.subr.mxu0 %v370
  %1606 = vmatpush1.msra.mxu0 %v369
  %1607 = vmatprep.subr.mxu0 %v373
  %1608 = vmatpush1.msra.mxu0 %v372
  %1609 = vmatprep.subr.mxu0 %v376
  %1610 = vmatpush1.msra.mxu0 %v375
  %1611 = vmatprep.subr.mxu0 %v379
  %1612 = vmatpush1.msra.mxu0 %v378
  %1613 = vmatprep.subr.mxu0 %v382
  %1614 = vmatpush1.msra.mxu0 %v381
  %1615 = vmatprep.subr.mxu0 %v385
  %1616 = vmatpush1.msra.mxu0 %v384
  %1617 = vmatprep.subr.mxu0 %v388
  %1618 = vmatpush1.msra.mxu0 %v387
  %1619 = vmatprep.subr.mxu0 %v391
  %1620 = vmatpush1.msra.mxu0 %v390
  %1621 = vmatprep.subr.mxu0 %v394
  %1622 = vmatpush1.msra.mxu0 %v393
  %1623 = vmatprep.subr.mxu0 %v397
  %1624 = vmatpush1.msra.mxu0 %v396
  %1625 = vmatprep.subr.mxu0 %v400
  %1626 = vmatpush1.msra.mxu0 %v399
  %1627 = vmatprep.subr.mxu0 0.0
  %1628 = vmatpush1.msra.mxu0 0.0
  %1629 = vmatprep.subr.mxu0 0.0
  %1630 = vmatpush1.msra.mxu0 0.0
  %1631 = vmatprep.subr.mxu0 0.0
  %1632 = vmatpush1.msra.mxu0 0.0
  %1633 = vmatprep.subr.mxu0 0.0
  %1634 = vmatpush1.msra.mxu0 0.0
  %1635 = vmatprep.subr.mxu0 0.0
  %1636 = vmatpush1.msra.mxu0 0.0
  %1637 = vmatprep.subr.mxu0 0.0
  %1638 = vmatpush1.msra.mxu0 0.0
  %1639 = vmatprep.subr.mxu0 0.0
  %1640 = vmatpush1.msra.mxu0 0.0
  %1641 = vmatprep.subr.mxu0 0.0
  %1642 = vmatpush1.msra.mxu0 0.0
  %1643 = vmatprep.subr.mxu0 0.0
  %1644 = vmatpush1.msra.mxu0 0.0
  %1645 = vmatprep.subr.mxu0 0.0
  %1646 = vmatpush1.msra.mxu0 0.0
  %1647 = vmatprep.subr.mxu0 0.0
  %1648 = vmatpush1.msra.mxu0 0.0
  %1649 = vmatprep.subr.mxu0 0.0
  %1650 = vmatpush1.msra.mxu0 0.0
  %1651 = vmatprep.subr.mxu0 0.0
  %1652 = vmatpush1.msra.mxu0 0.0
  %1653 = vmatprep.subr.mxu0 0.0
  %1654 = vmatpush1.msra.mxu0 0.0
  %1655 = vmatprep.subr.mxu0 0.0
  %1656 = vmatpush1.msra.mxu0 0.0
  %1657 = vmatprep.subr.mxu0 0.0
  %1658 = vmatpush1.msra.mxu0 0.0
  %1659 = vmatprep.mubr.f32.mxu0 0.0
  %1660 = vmatmul.mubr.f32.gmra.mrb[0].mxu0 %v1588
  %v1661 = vpop.f32.mrb[0].mxu0
  %v1662 = vadd.f32 %v407, %v1661
  %v1663 = vpop.f32.mrb[0].mxu0
  %v1664 = vadd.f32 %v411, %v1663
  %1665 = vdwg.mxu0
  %1666 = vmatprep.subr.mxu0 0.0
  %1667 = vmatpush1.msra.mxu0 %v356
  %1668 = vmatprep.subr.mxu0 0.0
  %1669 = vmatpush1.msra.mxu0 %v359
  %1670 = vmatprep.subr.mxu0 0.0
  %1671 = vmatpush1.msra.mxu0 %v362
  %1672 = vmatprep.subr.mxu0 0.0
  %1673 = vmatpush1.msra.mxu0 %v365
  %1674 = vmatprep.subr.mxu0 0.0
  %1675 = vmatpush1.msra.mxu0 %v368
  %1676 = vmatprep.subr.mxu0 0.0
  %1677 = vmatpush1.msra.mxu0 %v371
  %1678 = vmatprep.subr.mxu0 0.0
  %1679 = vmatpush1.msra.mxu0 %v374
  %1680 = vmatprep.subr.mxu0 0.0
  %1681 = vmatpush1.msra.mxu0 %v377
  %1682 = vmatprep.subr.mxu0 0.0
  %1683 = vmatpush1.msra.mxu0 %v380
  %1684 = vmatprep.subr.mxu0 0.0
  %1685 = vmatpush1.msra.mxu0 %v383
  %1686 = vmatprep.subr.mxu0 0.0
  %1687 = vmatpush1.msra.mxu0 %v386
  %1688 = vmatprep.subr.mxu0 0.0
  %1689 = vmatpush1.msra.mxu0 %v389
  %1690 = vmatprep.subr.mxu0 0.0
  %1691 = vmatpush1.msra.mxu0 %v392
  %1692 = vmatprep.subr.mxu0 0.0
  %1693 = vmatpush1.msra.mxu0 %v395
  %1694 = vmatprep.subr.mxu0 0.0
  %1695 = vmatpush1.msra.mxu0 %v398
  %1696 = vmatprep.subr.mxu0 0.0
  %1697 = vmatpush1.msra.mxu0 %v401
  %1698 = vmatprep.subr.mxu0 0.0
  %1699 = vmatpush1.msra.mxu0 0.0
  %1700 = vmatprep.subr.mxu0 0.0
  %1701 = vmatpush1.msra.mxu0 0.0
  %1702 = vmatprep.subr.mxu0 0.0
  %1703 = vmatpush1.msra.mxu0 0.0
  %1704 = vmatprep.subr.mxu0 0.0
  %1705 = vmatpush1.msra.mxu0 0.0
  %1706 = vmatprep.subr.mxu0 0.0
  %1707 = vmatpush1.msra.mxu0 0.0
  %1708 = vmatprep.subr.mxu0 0.0
  %1709 = vmatpush1.msra.mxu0 0.0
  %1710 = vmatprep.subr.mxu0 0.0
  %1711 = vmatpush1.msra.mxu0 0.0
  %1712 = vmatprep.subr.mxu0 0.0
  %1713 = vmatpush1.msra.mxu0 0.0
  %1714 = vmatprep.subr.mxu0 0.0
  %1715 = vmatpush1.msra.mxu0 0.0
  %1716 = vmatprep.subr.mxu0 0.0
  %1717 = vmatpush1.msra.mxu0 0.0
  %1718 = vmatprep.subr.mxu0 0.0
  %1719 = vmatpush1.msra.mxu0 0.0
  %1720 = vmatprep.subr.mxu0 0.0
  %1721 = vmatpush1.msra.mxu0 0.0
  %1722 = vmatprep.subr.mxu0 0.0
  %1723 = vmatpush1.msra.mxu0 0.0
  %1724 = vmatprep.subr.mxu0 0.0
  %1725 = vmatpush1.msra.mxu0 0.0
  %1726 = vmatprep.subr.mxu0 0.0
  %1727 = vmatpush1.msra.mxu0 0.0
  %1728 = vmatprep.subr.mxu0 0.0
  %1729 = vmatpush1.msra.mxu0 0.0
  %1730 = vmatprep.mubr.f32.mxu0 0.0
  %1731 = vmatmul.mubr.f32.gmra.mrb[0].mxu0 %v1588
  %v1732 = vpop.f32.mrb[0].mxu0
  %v1733 = vadd.f32 %v415, %v1732
  %v1734 = vpop.f32.mrb[0].mxu0
  %1735 = vdwg.mxu0
  %v1736 = vadd.f32 %v1592, %v1662
  %v1737 = vxor.u32 %v1736, 2147483648
  %v1738 = vmul.f32 %v1737, 1.442695
  %v1739 = vpow.pop %v1738
  %v1740 = vadd.f32 %v1739, 1.0
  %v1741 = vrcp.pop %v1740
  %v1742 = vmul.f32 1.0, %v1741
  %v1743 = vadd.f32 %v1593, %v1664
  %v1744 = vxor.u32 %v1743, 2147483648
  %v1745 = vmul.f32 %v1744, 1.442695
  %v1746 = vpow.pop %v1745
  %v1747 = vadd.f32 %v1746, 1.0
  %v1748 = vrcp.pop %v1747
  %v1749 = vmul.f32 1.0, %v1748
  %v1750 = vmul.f32 %v1742, %v1733
  %v1751 = vadd.f32 %v1594, %v1750
  %v1752 = vtanh.pop %v1751
  %v1753 = vsub.f32 1.0, %v1749
  %v1754 = vmul.f32 %v1753, %v1752
  %v1755 = vmul.f32 %v1749, %v1588
  %v1756 = vadd.f32 %v1754, %v1755
  %1757 = vst [vmem:[#allocation2] sm:$0xff] %v1756
  // Predicated region
  $region50: #{lstm_classifier_forward.1} parent=0 // pred_check
    %p1758 = pneg %p38
  $region51: #{lstm_classifier_forward.1} parent=0 // pred_check_branch
    %1760 = sbr.rel (%p1758) target = $region53
  $region52: #{lstm_classifier_forward.1} parent=0 // pred_region
    %v1761 = vld [vmem:[%s7] sm:$0x1]
    %v1763 = vlaneseq
    %v1764 = vshrl.u32 %v1763, 7
    %v1765 = vsub.s32 0, %v1764
    %v1766 = vrot.slane %v1761, %v1765
    %v1768 = vsub.f32 %v1756, %v1766
    %v1769 = vld [vmem:[%s8] sm:$0x1]
    %v1770 = vadd.f32 %v1769, 1e-05
    %v1771 = vrsqrt.pop %v1770
    %v1773 = vlaneseq
    %v1774 = vshrl.u32 %v1773, 7
    %v1775 = vsub.s32 0, %v1774
    %v1776 = vrot.slane %v1771, %v1775
    %v1778 = vmul.f32 %v1768, %v1776
    %v1779 = vld [vmem:[%s5] sm:$0x1]
    %v1781 = vlaneseq
    %v1782 = vshrl.u32 %v1781, 7
    %v1783 = vsub.s32 0, %v1782
    %v1784 = vrot.slane %v1779, %v1783
    %v1786 = vmul.f32 %v1778, %v1784
    %v1787 = vld [vmem:[%s6] sm:$0x1]
    %v1789 = vlaneseq
    %v1790 = vshrl.u32 %v1789, 7
    %v1791 = vsub.s32 0, %v1790
    %v1792 = vrot.slane %v1787, %v1791
    %v1794 = vadd.f32 %v1786, %v1792
    %v1795 = vmax.f32 %v1794, 0.0
    %v1796 = vld [vmem:[%s9] sm:$0xff]
    %v1797 = vld [vmem:[%s9 + $0x8] sm:$0xff]
    %v1798 = vld [vmem:[%s9 + $0x10] sm:$0xff]
    %v1799 = vld [vmem:[%s9 + $0x18] sm:$0xff]
    %v1800 = vld [vmem:[%s9 + $0x20] sm:$0xff]
    %v1801 = vld [vmem:[%s9 + $0x28] sm:$0xff]
    %v1802 = vld [vmem:[%s9 + $0x30] sm:$0xff]
    %v1803 = vld [vmem:[%s9 + $0x38] sm:$0xff]
    %v1804 = vld [vmem:[%s9 + $0x40] sm:$0xff]
    %v1805 = vld [vmem:[%s9 + $0x48] sm:$0xff]
    %v1806 = vld [vmem:[%s9 + $0x50] sm:$0xff]
    %v1807 = vld [vmem:[%s9 + $0x58] sm:$0xff]
    %v1808 = vld [vmem:[%s9 + $0x60] sm:$0xff]
    %v1809 = vld [vmem:[%s9 + $0x68] sm:$0xff]
    %v1810 = vld [vmem:[%s9 + $0x70] sm:$0xff]
    %v1811 = vld [vmem:[%s9 + $0x78] sm:$0xff]
    %v1812 = vld [vmem:[%s10] sm:$0x1]
    %v1814 = vlaneseq
    %v1815 = vshrl.u32 %v1814, 7
    %v1816 = vsub.s32 0, %v1815
    %v1817 = vrot.slane %v1812, %v1816
    %1819 = vmatprep.subr.mxu0 0.0
    %1820 = vmatpush1.msra.mxu0 %v1796
    %1821 = vmatprep.subr.mxu0 0.0
    %1822 = vmatpush1.msra.mxu0 %v1797
    %1823 = vmatprep.subr.mxu0 0.0
    %1824 = vmatpush1.msra.mxu0 %v1798
    %1825 = vmatprep.subr.mxu0 0.0
    %1826 = vmatpush1.msra.mxu0 %v1799
    %1827 = vmatprep.subr.mxu0 0.0
    %1828 = vmatpush1.msra.mxu0 %v1800
    %1829 = vmatprep.subr.mxu0 0.0
    %1830 = vmatpush1.msra.mxu0 %v1801
    %1831 = vmatprep.subr.mxu0 0.0
    %1832 = vmatpush1.msra.mxu0 %v1802
    %1833 = vmatprep.subr.mxu0 0.0
    %1834 = vmatpush1.msra.mxu0 %v1803
    %1835 = vmatprep.subr.mxu0 0.0
    %1836 = vmatpush1.msra.mxu0 %v1804
    %1837 = vmatprep.subr.mxu0 0.0
    %1838 = vmatpush1.msra.mxu0 %v1805
    %1839 = vmatprep.subr.mxu0 0.0
    %1840 = vmatpush1.msra.mxu0 %v1806
    %1841 = vmatprep.subr.mxu0 0.0
    %1842 = vmatpush1.msra.mxu0 %v1807
    %1843 = vmatprep.subr.mxu0 0.0
    %1844 = vmatpush1.msra.mxu0 %v1808
    %1845 = vmatprep.subr.mxu0 0.0
    %1846 = vmatpush1.msra.mxu0 %v1809
    %1847 = vmatprep.subr.mxu0 0.0
    %1848 = vmatpush1.msra.mxu0 %v1810
    %1849 = vmatprep.subr.mxu0 0.0
    %1850 = vmatpush1.msra.mxu0 %v1811
    %1851 = vmatprep.subr.mxu0 0.0
    %1852 = vmatpush1.msra.mxu0 0.0
    %1853 = vmatprep.subr.mxu0 0.0
    %1854 = vmatpush1.msra.mxu0 0.0
    %1855 = vmatprep.subr.mxu0 0.0
    %1856 = vmatpush1.msra.mxu0 0.0
    %1857 = vmatprep.subr.mxu0 0.0
    %1858 = vmatpush1.msra.mxu0 0.0
    %1859 = vmatprep.subr.mxu0 0.0
    %1860 = vmatpush1.msra.mxu0 0.0
    %1861 = vmatprep.subr.mxu0 0.0
    %1862 = vmatpush1.msra.mxu0 0.0
    %1863 = vmatprep.subr.mxu0 0.0
    %1864 = vmatpush1.msra.mxu0 0.0
    %1865 = vmatprep.subr.mxu0 0.0
    %1866 = vmatpush1.msra.mxu0 0.0
    %1867 = vmatprep.subr.mxu0 0.0
    %1868 = vmatpush1.msra.mxu0 0.0
    %1869 = vmatprep.subr.mxu0 0.0
    %1870 = vmatpush1.msra.mxu0 0.0
    %1871 = vmatprep.subr.mxu0 0.0
    %1872 = vmatpush1.msra.mxu0 0.0
    %1873 = vmatprep.subr.mxu0 0.0
    %1874 = vmatpush1.msra.mxu0 0.0
    %1875 = vmatprep.subr.mxu0 0.0
    %1876 = vmatpush1.msra.mxu0 0.0
    %1877 = vmatprep.subr.mxu0 0.0
    %1878 = vmatpush1.msra.mxu0 0.0
    %1879 = vmatprep.subr.mxu0 0.0
    %1880 = vmatpush1.msra.mxu0 0.0
    %1881 = vmatprep.subr.mxu0 0.0
    %1882 = vmatpush1.msra.mxu0 0.0
    %1883 = vmatprep.mubr.f32.mxu0 0.0
    %1884 = vmatmul.mubr.f32.gmra.mrb[0].mxu0 %v1795
    %v1885 = vpop.f32.mrb[0].mxu0
    %v1886 = vadd.f32 %v1817, %v1885
    %v1887 = vpop.f32.mrb[0].mxu0
    %1888 = vdwg.mxu0
    %vm1889 = vcmask 39936
    %1890 = vst.msk [vmem:[%s11] sm:$0xff] %vm1889, %v1886
  $region53: #{lstm_classifier_forward.1} parent=0 // pred_fallthru
    _
  // Predicated region
  $region54: #{lstm_classifier_forward.1} parent=0 // pred_check
    _
  $region55: #{lstm_classifier_forward.1} parent=0 // pred_check_branch
    %1892 = sbr.rel (0) target = $region57
  $region56: #{lstm_classifier_forward.1} parent=0 // pred_region
    _
  $region57: #{lstm_classifier_forward.1} parent=0 // pred_fallthru
    _
  // Predicated region
  $region58: #{lstm_classifier_forward.1} parent=0 // pred_check
    _
  $region59: #{lstm_classifier_forward.1} parent=0 // pred_check_branch
    %1894 = sbr.rel (0) target = $region61
  $region60: #{lstm_classifier_forward.1} parent=0 // pred_region
    _
  $region61: #{lstm_classifier_forward.1} parent=0 // pred_fallthru
    _

</llo_original>
